<compile_context>
chip_gen: v7x
topology: tpu7x:2x2x1
jax: 0.10.0
libtpu: 0.0.40
codegen_flags: <defaults>
</compile_context>

<pallas_src>
import functools

import jax
import jax.numpy as jnp
from jax.experimental import pallas as pl
from jax.experimental.pallas import tpu as pltpu


def block_kernel(x_ref, w1_ref, s1_ref, b1_ref,
                 w2_ref, s2_ref, b2_ref,
                 w3_ref, s3_ref, b3_ref,
                 o_ref):
    """Fused bottleneck block for a tile of `bb` batch elements (NHWC)."""
    BB, H, W, Cin = x_ref.shape
    Cmid = w1_ref.shape[1]
    M = BB * H * W
    cdt = w1_ref.dtype                      # matmul dtype (f32 or bf16)

    # --- conv1 (1x1) + BN1 + ReLU : plain matmul over channels ---------------
    x = x_ref[...].reshape(M, Cin)
    y1 = jnp.dot(x.astype(cdt), w1_ref[...],
                 preferred_element_type=jnp.float32)
    y1 = jnp.maximum(y1 * s1_ref[...] + b1_ref[...], 0.0)

    # --- conv2 (3x3, stride=1, pad=1) + BN2 + ReLU ----------------------------
    # im2col held in values: build the zero-padded activation by value-level
    # concatenation, gather the 9 taps, and do one K = 9*Cmid matmul against
    # the pre-reshaped (9*Cmid, Cmid) weight.
    y1_4d = y1.reshape(BB, H, W, Cmid).astype(cdt)
    zcol = jnp.zeros((BB, H, 1, Cmid), y1_4d.dtype)
    y1p = jnp.concatenate([zcol, y1_4d, zcol], axis=2)       # (BB, H,   W+2, C)
    zrow = jnp.zeros((BB, 1, W + 2, Cmid), y1_4d.dtype)
    y1p = jnp.concatenate([zrow, y1p, zrow], axis=1)          # (BB, H+2, W+2, C)

    taps = []
    for ky in range(3):                 # ky-major, kx-minor, channels fastest:
        for kx in range(3):             # matches w2.reshape(9*Cmid, Cmid).
            taps.append(y1p[:, ky:ky + H, kx:kx + W, :])
    patches = jnp.concatenate(taps, axis=-1).reshape(M, 9 * Cmid)

    y2 = jnp.dot(patches, w2_ref[...], preferred_element_type=jnp.float32)
    y2 = jnp.maximum(y2 * s2_ref[...] + b2_ref[...], 0.0)

    # --- conv3 (1x1) + BN3 + residual add + ReLU ------------------------------
    y3 = jnp.dot(y2.astype(cdt), w3_ref[...],
                 preferred_element_type=jnp.float32)
    identity = x_ref[...].reshape(M, Cin).astype(jnp.float32)   # re-read block
    y3 = y3 * s3_ref[...] + b3_ref[...] + identity
    o_ref[...] = jnp.maximum(y3, 0.0).reshape(BB, H, W, Cin).astype(o_ref.dtype)


def _batch_block(B, HW, target_rows=1024):
    """Largest divisor of B keeping M = bb*HW around `target_rows` MXU rows."""
    target = max(1, target_rows // HW)
    bb = 1
    for d in range(1, B + 1):
        if B % d == 0 and d <= target:
            bb = d
    return bb


@functools.partial(jax.jit, static_argnames=("matmul_dtype",))
def block_forward_nchw(x_nchw, w1, s1, b1, w2, s2, b2, w3, s3, b3,
                       *, matmul_dtype=jnp.float32):
    # NCHW (PyTorch) -> NHWC (kernel layout)
    x = jnp.transpose(x_nchw, (0, 2, 3, 1))
    B, H, W, Cin = x.shape
    Cmid = w1.shape[1]
    Cout = w3.shape[1]
    assert Cout == Cin, "identity_downsample=None requires in_ch == out_ch*4"

    # Pre-reshape the 3x3 weight (HWIO) to a lane-dense im2col matrix.
    w2_mat = w2.reshape(9 * Cmid, Cmid)

    cdt = matmul_dtype
    w1c = w1.astype(cdt)
    w2c = w2_mat.astype(cdt)
    w3c = w3.astype(cdt)

    bb = _batch_block(B, H * W)            # fold batch into the matmul M dim
    grid = (B // bb,)

    def full(a):
        return pl.BlockSpec(a.shape, lambda i: (0,) * a.ndim)

    out_nhwc = pl.pallas_call(
        block_kernel,
        out_shape=jax.ShapeDtypeStruct((B, H, W, Cout), x.dtype),
        grid_spec=pltpu.PrefetchScalarGridSpec(
            num_scalar_prefetch=0,
            grid=grid,
            in_specs=[
                pl.BlockSpec((bb, H, W, Cin), lambda i: (i, 0, 0, 0)),  # x
                full(w1c), full(s1), full(b1),
                full(w2c), full(s2), full(b2),
                full(w3c), full(s3), full(b3),
            ],
            out_specs=pl.BlockSpec((bb, H, W, Cout), lambda i: (i, 0, 0, 0)),
        ),
        compiler_params=pltpu.CompilerParams(
            # Disjoint output tiles per grid step -> safe to shard across the
            # two TensorCores on v7x; harmless on single-TC v5e/v6e.
            dimension_semantics=("parallel",)),
    )(x, w1c, s1, b1, w2c, s2, b2, w3c, s3, b3)

    # NHWC -> NCHW to match the PyTorch module's output convention
    return jnp.transpose(out_nhwc, (0, 3, 1, 2))


def block_reference_nchw(x_nchw, w1, s1, b1, w2, s2, b2, w3, s3, b3):
    """Pure-JAX reference (same folded-BN semantics) for correctness check."""
    x = jnp.transpose(x_nchw, (0, 2, 3, 1))
    y = jnp.einsum('bhwc,cd->bhwd', x, w1) * s1 + b1
    y = jnp.maximum(y, 0.0)
    y = jax.lax.conv_general_dilated(
        y, w2, window_strides=(1, 1), padding='SAME',
        dimension_numbers=('NHWC', 'HWIO', 'NHWC')) * s2 + b2
    y = jnp.maximum(y, 0.0)
    y = jnp.einsum('bhwc,cd->bhwd', y, w3) * s3 + b3 + x
    y = jnp.maximum(y, 0.0)
    return jnp.transpose(y, (0, 3, 1, 2))


def fold_bn(conv_bias, gamma, beta, mean, var, eps=1e-5):
    """Fold conv bias + BatchNorm (running stats) into per-channel scale/bias."""
    scale = gamma / jnp.sqrt(var + eps)
    bias = beta + (conv_bias - mean) * scale
    return scale[None, :], bias[None, :]          # shape (1, C) for broadcast


def make_params(key, in_channels, out_channels):
    expansion = 4
    cmid = out_channels
    cout = out_channels * expansion
    assert cout == in_channels

    ks = list(jax.random.split(key, 16))

    def normal(k, shape, s=0.05):
        return jax.random.normal(k, shape, jnp.float32) * s

    # conv weights already in kernel layout:
    #   conv1: (Cin, Cmid)        [PyTorch (Cmid, Cin, 1, 1) transposed]
    #   conv2: (3, 3, Cmid, Cmid) HWIO  [PyTorch (O, I, 3, 3) -> (H, W, I, O)]
    #   conv3: (Cmid, Cout)
    w1 = normal(ks[0], (in_channels, cmid))
    w2 = normal(ks[1], (3, 3, cmid, cmid))
    w3 = normal(ks[2], (cmid, cout))
    cb1 = normal(ks[3], (cmid,))
    cb2 = normal(ks[4], (cmid,))
    cb3 = normal(ks[5], (cout,))

    def bn(kg, kb, km, kv, c):
        gamma = jax.random.uniform(kg, (c,), jnp.float32, 0.5, 1.5)
        beta = normal(kb, (c,))
        mean = normal(km, (c,))
        var = jax.random.uniform(kv, (c,), jnp.float32, 0.5, 1.5)
        return gamma, beta, mean, var

    s1, b1 = fold_bn(cb1, *bn(ks[6], ks[7], ks[8], ks[9], cmid))
    s2, b2 = fold_bn(cb2, *bn(ks[10], ks[11], ks[12], ks[13], cmid))
    s3, b3 = fold_bn(cb3, *bn(ks[14], ks[15], ks[0], ks[1], cout))
    return w1, s1, b1, w2, s2, b2, w3, s3, b3


if __name__ == "__main__":
    # Small shapes: batch=2, in_channels=128, out_channels=32 (expansion 4 =>
    # residual channels match), spatial 8x8, stride=1, identity_downsample=None.
    B, Cin, H, W = 2, 128, 8, 8
    out_channels = 32

    key = jax.random.PRNGKey(0)
    kx, kp = jax.random.split(key)
    x_nchw = jax.random.normal(kx, (B, Cin, H, W), jnp.float32)
    params = make_params(kp, Cin, out_channels)

    out = block_forward_nchw(x_nchw, *params)
    out = jax.block_until_ready(out)

    ref = block_reference_nchw(x_nchw, *params)
    ref = jax.block_until_ready(ref)

    assert out.shape == (B, Cin, H, W), out.shape
    assert jnp.allclose(out, ref, atol=1e-4, rtol=1e-4), \
        float(jnp.max(jnp.abs(out - ref)))

    print("KERNEL_OK")
</pallas_src>

<mosaic_0001>
module attributes {stable_mosaic.version = 11 : i64} {
  func.func @block_kernel(%arg0: i32, %arg1: memref<2x8x8x128xf32, #tpu.memory_space<vmem>>, %arg2: memref<128x32xf32, #tpu.memory_space<vmem>>, %arg3: memref<1x32xf32, #tpu.memory_space<vmem>>, %arg4: memref<1x32xf32, #tpu.memory_space<vmem>>, %arg5: memref<288x32xf32, #tpu.memory_space<vmem>>, %arg6: memref<1x32xf32, #tpu.memory_space<vmem>>, %arg7: memref<1x32xf32, #tpu.memory_space<vmem>>, %arg8: memref<32x128xf32, #tpu.memory_space<vmem>>, %arg9: memref<1x128xf32, #tpu.memory_space<vmem>>, %arg10: memref<1x128xf32, #tpu.memory_space<vmem>>, %arg11: memref<2x8x8x128xf32, #tpu.memory_space<vmem>>) attributes {dimension_semantics = [#tpu.dimension_semantics<parallel>], iteration_bounds = array<i64: 1>, scalar_prefetch = 0 : i64, scratch_operands = 0 : i64, tpu.core_type = #tpu.core_type<tc>, window_params = [{transform_indices = @transform_0, window_bounds = array<i64: 2, 8, 8, 128>}, {pipeline_mode = #tpu.pipeline_mode<synchronous>, transform_indices = @transform_1, window_bounds = array<i64: 128, 32>}, {pipeline_mode = #tpu.pipeline_mode<synchronous>, transform_indices = @transform_2, window_bounds = array<i64: 1, 32>}, {pipeline_mode = #tpu.pipeline_mode<synchronous>, transform_indices = @transform_3, window_bounds = array<i64: 1, 32>}, {pipeline_mode = #tpu.pipeline_mode<synchronous>, transform_indices = @transform_4, window_bounds = array<i64: 288, 32>}, {pipeline_mode = #tpu.pipeline_mode<synchronous>, transform_indices = @transform_5, window_bounds = array<i64: 1, 32>}, {pipeline_mode = #tpu.pipeline_mode<synchronous>, transform_indices = @transform_6, window_bounds = array<i64: 1, 32>}, {pipeline_mode = #tpu.pipeline_mode<synchronous>, transform_indices = @transform_7, window_bounds = array<i64: 32, 128>}, {pipeline_mode = #tpu.pipeline_mode<synchronous>, transform_indices = @transform_8, window_bounds = array<i64: 1, 128>}, {pipeline_mode = #tpu.pipeline_mode<synchronous>, transform_indices = @transform_9, window_bounds = array<i64: 1, 128>}, {transform_indices = @transform_10, window_bounds = array<i64: 2, 8, 8, 128>}]} {
    %c0 = arith.constant 0 : index
    %c0_0 = arith.constant 0 : index
    %c0_1 = arith.constant 0 : index
    %c0_2 = arith.constant 0 : index
    %0 = vector.load %arg1[%c0, %c0_0, %c0_1, %c0_2] : memref<2x8x8x128xf32, #tpu.memory_space<vmem>>, vector<2x8x8x128xf32>
    %1 = vector.shape_cast %0 : vector<2x8x8x128xf32> to vector<128x128xf32>
    %c0_3 = arith.constant 0 : index
    %c0_4 = arith.constant 0 : index
    %2 = vector.load %arg2[%c0_3, %c0_4] : memref<128x32xf32, #tpu.memory_space<vmem>>, vector<128x32xf32>
    %cst = arith.constant dense<0.000000e+00> : vector<128x32xf32>
    %3 = tpu.matmul %1, %2, %cst {dimension_numbers = #tpu.dot_dimension_numbers<[1], [0], [0], [1], [0, 0, 1, 1], [], []>} : vector<128x128xf32>, vector<128x32xf32>, vector<128x32xf32> -> vector<128x32xf32>
    %c0_5 = arith.constant 0 : index
    %c0_6 = arith.constant 0 : index
    %4 = vector.load %arg3[%c0_5, %c0_6] : memref<1x32xf32, #tpu.memory_space<vmem>>, vector<1x32xf32>
    %5 = vector.broadcast %4 : vector<1x32xf32> to vector<128x32xf32>
    %6 = arith.mulf %3, %5 : vector<128x32xf32>
    %c0_7 = arith.constant 0 : index
    %c0_8 = arith.constant 0 : index
    %7 = vector.load %arg4[%c0_7, %c0_8] : memref<1x32xf32, #tpu.memory_space<vmem>>, vector<1x32xf32>
    %8 = vector.broadcast %7 : vector<1x32xf32> to vector<128x32xf32>
    %9 = arith.addf %6, %8 : vector<128x32xf32>
    %cst_9 = arith.constant 0.000000e+00 : f32
    %10 = vector.broadcast %cst_9 : f32 to vector<128x32xf32>
    %11 = arith.maximumf %9, %10 : vector<128x32xf32>
    %12 = vector.shape_cast %11 : vector<128x32xf32> to vector<2x8x8x32xf32>
    %cst_10 = arith.constant 0.000000e+00 : f32
    %13 = vector.broadcast %cst_10 : f32 to vector<2x8x1x32xf32>
    %14 = tpu.concatenate %13, %12, %13 in 2 : vector<2x8x1x32xf32>, vector<2x8x8x32xf32>, vector<2x8x1x32xf32> -> vector<2x8x10x32xf32>
    %cst_11 = arith.constant 0.000000e+00 : f32
    %15 = vector.broadcast %cst_11 : f32 to vector<2x1x10x32xf32>
    %16 = tpu.concatenate %15, %14, %15 in 1 : vector<2x1x10x32xf32>, vector<2x8x10x32xf32>, vector<2x1x10x32xf32> -> vector<2x10x10x32xf32>
    %17 = vector.extract_strided_slice %16 {offsets = [0, 0, 0, 0], sizes = [2, 8, 8, 32], strides = [1, 1, 1, 1]} : vector<2x10x10x32xf32> to vector<2x8x8x32xf32>
    %18 = vector.extract_strided_slice %16 {offsets = [0, 0, 1, 0], sizes = [2, 8, 8, 32], strides = [1, 1, 1, 1]} : vector<2x10x10x32xf32> to vector<2x8x8x32xf32>
    %19 = vector.extract_strided_slice %16 {offsets = [0, 0, 2, 0], sizes = [2, 8, 8, 32], strides = [1, 1, 1, 1]} : vector<2x10x10x32xf32> to vector<2x8x8x32xf32>
    %20 = vector.extract_strided_slice %16 {offsets = [0, 1, 0, 0], sizes = [2, 8, 8, 32], strides = [1, 1, 1, 1]} : vector<2x10x10x32xf32> to vector<2x8x8x32xf32>
    %21 = vector.extract_strided_slice %16 {offsets = [0, 1, 1, 0], sizes = [2, 8, 8, 32], strides = [1, 1, 1, 1]} : vector<2x10x10x32xf32> to vector<2x8x8x32xf32>
    %22 = vector.extract_strided_slice %16 {offsets = [0, 1, 2, 0], sizes = [2, 8, 8, 32], strides = [1, 1, 1, 1]} : vector<2x10x10x32xf32> to vector<2x8x8x32xf32>
    %23 = vector.extract_strided_slice %16 {offsets = [0, 2, 0, 0], sizes = [2, 8, 8, 32], strides = [1, 1, 1, 1]} : vector<2x10x10x32xf32> to vector<2x8x8x32xf32>
    %24 = vector.extract_strided_slice %16 {offsets = [0, 2, 1, 0], sizes = [2, 8, 8, 32], strides = [1, 1, 1, 1]} : vector<2x10x10x32xf32> to vector<2x8x8x32xf32>
    %25 = vector.extract_strided_slice %16 {offsets = [0, 2, 2, 0], sizes = [2, 8, 8, 32], strides = [1, 1, 1, 1]} : vector<2x10x10x32xf32> to vector<2x8x8x32xf32>
    %26 = tpu.concatenate %17, %18, %19, %20, %21, %22, %23, %24, %25 in 3 : vector<2x8x8x32xf32>, vector<2x8x8x32xf32>, vector<2x8x8x32xf32>, vector<2x8x8x32xf32>, vector<2x8x8x32xf32>, vector<2x8x8x32xf32>, vector<2x8x8x32xf32>, vector<2x8x8x32xf32>, vector<2x8x8x32xf32> -> vector<2x8x8x288xf32>
    %27 = vector.shape_cast %26 : vector<2x8x8x288xf32> to vector<128x288xf32>
    %c0_12 = arith.constant 0 : index
    %c0_13 = arith.constant 0 : index
    %28 = vector.load %arg5[%c0_12, %c0_13] : memref<288x32xf32, #tpu.memory_space<vmem>>, vector<288x32xf32>
    %cst_14 = arith.constant dense<0.000000e+00> : vector<128x32xf32>
    %29 = tpu.matmul %27, %28, %cst_14 {dimension_numbers = #tpu.dot_dimension_numbers<[1], [0], [0], [1], [0, 0, 1, 1], [], []>} : vector<128x288xf32>, vector<288x32xf32>, vector<128x32xf32> -> vector<128x32xf32>
    %c0_15 = arith.constant 0 : index
    %c0_16 = arith.constant 0 : index
    %30 = vector.load %arg6[%c0_15, %c0_16] : memref<1x32xf32, #tpu.memory_space<vmem>>, vector<1x32xf32>
    %31 = vector.broadcast %30 : vector<1x32xf32> to vector<128x32xf32>
    %32 = arith.mulf %29, %31 : vector<128x32xf32>
    %c0_17 = arith.constant 0 : index
    %c0_18 = arith.constant 0 : index
    %33 = vector.load %arg7[%c0_17, %c0_18] : memref<1x32xf32, #tpu.memory_space<vmem>>, vector<1x32xf32>
    %34 = vector.broadcast %33 : vector<1x32xf32> to vector<128x32xf32>
    %35 = arith.addf %32, %34 : vector<128x32xf32>
    %cst_19 = arith.constant 0.000000e+00 : f32
    %36 = vector.broadcast %cst_19 : f32 to vector<128x32xf32>
    %37 = arith.maximumf %35, %36 : vector<128x32xf32>
    %c0_20 = arith.constant 0 : index
    %c0_21 = arith.constant 0 : index
    %38 = vector.load %arg8[%c0_20, %c0_21] : memref<32x128xf32, #tpu.memory_space<vmem>>, vector<32x128xf32>
    %cst_22 = arith.constant dense<0.000000e+00> : vector<128x128xf32>
    %39 = tpu.matmul %37, %38, %cst_22 {dimension_numbers = #tpu.dot_dimension_numbers<[1], [0], [0], [1], [0, 0, 1, 1], [], []>} : vector<128x32xf32>, vector<32x128xf32>, vector<128x128xf32> -> vector<128x128xf32>
    %c0_23 = arith.constant 0 : index
    %c0_24 = arith.constant 0 : index
    %c0_25 = arith.constant 0 : index
    %c0_26 = arith.constant 0 : index
    %40 = vector.load %arg1[%c0_23, %c0_24, %c0_25, %c0_26] : memref<2x8x8x128xf32, #tpu.memory_space<vmem>>, vector<2x8x8x128xf32>
    %41 = vector.shape_cast %40 : vector<2x8x8x128xf32> to vector<128x128xf32>
    %c0_27 = arith.constant 0 : index
    %c0_28 = arith.constant 0 : index
    %42 = vector.load %arg9[%c0_27, %c0_28] : memref<1x128xf32, #tpu.memory_space<vmem>>, vector<1x128xf32>
    %43 = vector.broadcast %42 : vector<1x128xf32> to vector<128x128xf32>
    %44 = arith.mulf %39, %43 : vector<128x128xf32>
    %c0_29 = arith.constant 0 : index
    %c0_30 = arith.constant 0 : index
    %45 = vector.load %arg10[%c0_29, %c0_30] : memref<1x128xf32, #tpu.memory_space<vmem>>, vector<1x128xf32>
    %46 = vector.broadcast %45 : vector<1x128xf32> to vector<128x128xf32>
    %47 = arith.addf %44, %46 : vector<128x128xf32>
    %48 = arith.addf %47, %41 : vector<128x128xf32>
    %cst_31 = arith.constant 0.000000e+00 : f32
    %49 = vector.broadcast %cst_31 : f32 to vector<128x128xf32>
    %50 = arith.maximumf %48, %49 : vector<128x128xf32>
    %51 = vector.shape_cast %50 : vector<128x128xf32> to vector<2x8x8x128xf32>
    %c0_32 = arith.constant 0 : index
    %c0_33 = arith.constant 0 : index
    %c0_34 = arith.constant 0 : index
    %c0_35 = arith.constant 0 : index
    %52 = vector.load %arg11[%c0_32, %c0_33, %c0_34, %c0_35] : memref<2x8x8x128xf32, #tpu.memory_space<vmem>>, vector<2x8x8x128xf32>
    tpu.vector_store %arg11[%c0_32, %c0_33, %c0_34, %c0_35], %51 {strides = array<i32>} : memref<2x8x8x128xf32, #tpu.memory_space<vmem>>, vector<2x8x8x128xf32>,
    return
  }
  func.func @transform_0(%arg0: i32) -> (i32, i32, i32, i32) {
    %c0_i32 = arith.constant 0 : i32
    %c0_i32_0 = arith.constant 0 : i32
    %c0_i32_1 = arith.constant 0 : i32
    %c0_i32_2 = arith.constant 0 : i32
    return %arg0, %c0_i32, %c0_i32_0, %c0_i32_1 : i32, i32, i32, i32
  }
  func.func @transform_1(%arg0: i32) -> (i32, i32) {
    %c0_i32 = arith.constant 0 : i32
    %c0_i32_0 = arith.constant 0 : i32
    %c0_i32_1 = arith.constant 0 : i32
    return %c0_i32, %c0_i32_0 : i32, i32
  }
  func.func @transform_2(%arg0: i32) -> (i32, i32) {
    %c0_i32 = arith.constant 0 : i32
    %c0_i32_0 = arith.constant 0 : i32
    %c0_i32_1 = arith.constant 0 : i32
    return %c0_i32, %c0_i32_0 : i32, i32
  }
  func.func @transform_3(%arg0: i32) -> (i32, i32) {
    %c0_i32 = arith.constant 0 : i32
    %c0_i32_0 = arith.constant 0 : i32
    %c0_i32_1 = arith.constant 0 : i32
    return %c0_i32, %c0_i32_0 : i32, i32
  }
  func.func @transform_4(%arg0: i32) -> (i32, i32) {
    %c0_i32 = arith.constant 0 : i32
    %c0_i32_0 = arith.constant 0 : i32
    %c0_i32_1 = arith.constant 0 : i32
    return %c0_i32, %c0_i32_0 : i32, i32
  }
  func.func @transform_5(%arg0: i32) -> (i32, i32) {
    %c0_i32 = arith.constant 0 : i32
    %c0_i32_0 = arith.constant 0 : i32
    %c0_i32_1 = arith.constant 0 : i32
    return %c0_i32, %c0_i32_0 : i32, i32
  }
  func.func @transform_6(%arg0: i32) -> (i32, i32) {
    %c0_i32 = arith.constant 0 : i32
    %c0_i32_0 = arith.constant 0 : i32
    %c0_i32_1 = arith.constant 0 : i32
    return %c0_i32, %c0_i32_0 : i32, i32
  }
  func.func @transform_7(%arg0: i32) -> (i32, i32) {
    %c0_i32 = arith.constant 0 : i32
    %c0_i32_0 = arith.constant 0 : i32
    %c0_i32_1 = arith.constant 0 : i32
    return %c0_i32, %c0_i32_0 : i32, i32
  }
  func.func @transform_8(%arg0: i32) -> (i32, i32) {
    %c0_i32 = arith.constant 0 : i32
    %c0_i32_0 = arith.constant 0 : i32
    %c0_i32_1 = arith.constant 0 : i32
    return %c0_i32, %c0_i32_0 : i32, i32
  }
  func.func @transform_9(%arg0: i32) -> (i32, i32) {
    %c0_i32 = arith.constant 0 : i32
    %c0_i32_0 = arith.constant 0 : i32
    %c0_i32_1 = arith.constant 0 : i32
    return %c0_i32, %c0_i32_0 : i32, i32
  }
  func.func @transform_10(%arg0: i32) -> (i32, i32, i32, i32) {
    %c0_i32 = arith.constant 0 : i32
    %c0_i32_0 = arith.constant 0 : i32
    %c0_i32_1 = arith.constant 0 : i32
    %c0_i32_2 = arith.constant 0 : i32
    return %arg0, %c0_i32, %c0_i32_0, %c0_i32_1 : i32, i32, i32, i32
  }
}

</mosaic_0001>

<llo_original>
// kernel: block_forward_nchw.1
$region0: #{block_forward_nchw.1}
  #allocation0 [shape = 'u32[]', space=smem, size = 0x4, offset = 0x4, fixed_abs, tag = 'smem constant byte address 0x4 - core index']
  #allocation1 [shape = 'u32[144,128]{1,0:T(1,128)}', space=vmem, size = 0x12000, scoped, tag = 'internal scratch']
  %s0 = inlined_call_operand.vmem [shape: f32[2,8,8,128], index: 0, kind: input, shape index: {}]
  %s1 = inlined_call_operand.vmem [shape: f32[128,32], index: 1, kind: input, shape index: {}]
  %s2 = inlined_call_operand.vmem [shape: f32[1,32], index: 2, kind: input, shape index: {}]
  %s3 = inlined_call_operand.vmem [shape: f32[1,32], index: 3, kind: input, shape index: {}]
  %s4 = inlined_call_operand.hbm [shape: f32[288,32], index: 4, kind: input, shape index: {}]
  %s5 = inlined_call_operand.vmem [shape: f32[1,32], index: 5, kind: input, shape index: {}]
  %s6 = inlined_call_operand.vmem [shape: f32[1,32], index: 6, kind: input, shape index: {}]
  %s7 = inlined_call_operand.vmem [shape: f32[32,128], index: 7, kind: input, shape index: {}]
  %s8 = inlined_call_operand.vmem [shape: f32[1,128], index: 8, kind: input, shape index: {}]
  %s9 = inlined_call_operand.vmem [shape: f32[1,128], index: 9, kind: input, shape index: {}]
  %s10 = inlined_call_operand.hbm [shape: f32[2,8,8,128], index: 10, kind: output, shape index: {}]
  %s11 = sld [smem:[#allocation0]]
  $region54: #{block_forward_nchw.1} parent=0
    _
  %s13 = ssub.s32 1, %s11
  %s14 = scalar_select 0, %s13, %s11
  $region1: #{block_forward_nchw.1} parent=0
    #allocation2 [shape = 'u8[147456]{0}', space=vmem, size = 0x24000, scoped, tag = 'input window, operand 4, single buffered']
    #allocation3 [shape = 's32[1]{0}', space=sflag, size = 0x4, scoped, tag = 'scoped memory for block_forward_nchw.1']
    #allocation4 [shape = 's32[1]{0}', space=sflag, size = 0x4, scoped, tag = 'scoped memory for block_forward_nchw.1']
    #allocation5 [shape = 'u8[65536]{0}', space=vmem, size = 0x10000, scoped, tag = 'output window, operand 0, single buffered']
    %15 = vsyncpa [#allocation3], 0
    %16 = vsyncpa [#allocation4], 0
    // Predicated region
    $region2: #{block_forward_nchw.1} parent=1 // pred_check
      _
    $region3: #{block_forward_nchw.1} parent=1 // pred_check_branch
      %18 = sbr.rel (0) target = $region5
    $region4: #{block_forward_nchw.1} parent=1 // pred_region
      _
    $region5: #{block_forward_nchw.1} parent=1 // pred_fallthru
      _
    // Predicated region
    $region6: #{block_forward_nchw.1} parent=1 // pred_check
      _
    $region7: #{block_forward_nchw.1} parent=1 // pred_check_branch
      %20 = sbr.rel (0) target = $region9
    $region8: #{block_forward_nchw.1} parent=1 // pred_region
      _
    $region9: #{block_forward_nchw.1} parent=1 // pred_fallthru
      _
    // Predicated region
    $region10: #{block_forward_nchw.1} parent=1 // pred_check
      _
    $region11: #{block_forward_nchw.1} parent=1 // pred_check_branch
      %22 = sbr.rel (0) target = $region13
    $region12: #{block_forward_nchw.1} parent=1 // pred_region
      _
    $region13: #{block_forward_nchw.1} parent=1 // pred_fallthru
      _
    // Predicated region
    $region14: #{block_forward_nchw.1} parent=1 // pred_check
      _
    $region15: #{block_forward_nchw.1} parent=1 // pred_check_branch
      %24 = sbr.rel (0) target = $region17
    $region16: #{block_forward_nchw.1} parent=1 // pred_region
      _
    $region17: #{block_forward_nchw.1} parent=1 // pred_fallthru
      _
    // Predicated region
    $region18: #{block_forward_nchw.1} parent=1 // pred_check
      _
    $region19: #{block_forward_nchw.1} parent=1 // pred_check_branch
      %26 = sbr.rel (0) target = $region21
    $region20: #{block_forward_nchw.1} parent=1 // pred_region
      %s28 = ssub.s32 4608, 4608
      %29 = vsyncadd [#allocation3], %s28
      %s30 = sshll.u32 [#allocation2], 4
      %s31 = int_to_ptr.vmem [resolvable:$true] %s30
      %36 = dma.hbm_to_vmem [thread:$0]  %s4, 4608, %s31, [#allocation3], 128, 128, 8
    $region21: #{block_forward_nchw.1} parent=1 // pred_fallthru
      _
    // Predicated region
    $region22: #{block_forward_nchw.1} parent=1 // pred_check
      _
    $region23: #{block_forward_nchw.1} parent=1 // pred_check_branch
      %38 = sbr.rel (0) target = $region25
    $region24: #{block_forward_nchw.1} parent=1 // pred_region
      _
    $region25: #{block_forward_nchw.1} parent=1 // pred_fallthru
      _
    // Predicated region
    $region26: #{block_forward_nchw.1} parent=1 // pred_check
      _
    $region27: #{block_forward_nchw.1} parent=1 // pred_check_branch
      %40 = sbr.rel (0) target = $region29
    $region28: #{block_forward_nchw.1} parent=1 // pred_region
      _
    $region29: #{block_forward_nchw.1} parent=1 // pred_fallthru
      _
    // Predicated region
    $region30: #{block_forward_nchw.1} parent=1 // pred_check
      _
    $region31: #{block_forward_nchw.1} parent=1 // pred_check_branch
      %42 = sbr.rel (0) target = $region33
    $region32: #{block_forward_nchw.1} parent=1 // pred_region
      _
    $region33: #{block_forward_nchw.1} parent=1 // pred_fallthru
      _
    // Predicated region
    $region34: #{block_forward_nchw.1} parent=1 // pred_check
      _
    $region35: #{block_forward_nchw.1} parent=1 // pred_check_branch
      %44 = sbr.rel (0) target = $region37
    $region36: #{block_forward_nchw.1} parent=1 // pred_region
      _
    $region37: #{block_forward_nchw.1} parent=1 // pred_fallthru
      _
    // Predicated region
    $region38: #{block_forward_nchw.1} parent=1 // pred_check
      _
    $region39: #{block_forward_nchw.1} parent=1 // pred_check_branch
      %46 = sbr.rel (0) target = $region41
    $region40: #{block_forward_nchw.1} parent=1 // pred_region
      _
    $region41: #{block_forward_nchw.1} parent=1 // pred_fallthru
      _
    // Predicated region
    $region42: #{block_forward_nchw.1} parent=1 // pred_check
      _
    $region43: #{block_forward_nchw.1} parent=1 // pred_check_branch
      %48 = sbr.rel (0) target = $region45
    $region44: #{block_forward_nchw.1} parent=1 // pred_region
      %49 = dma.done [#allocation3], 4608
    $region45: #{block_forward_nchw.1} parent=1 // pred_fallthru
      _
    %v50 = vld [vmem:[%s0] sm:$0xff]
    %v51 = vld [vmem:[%s0 + $0x8] sm:$0xff]
    %v52 = vld [vmem:[%s0 + $0x10] sm:$0xff]
    %v53 = vld [vmem:[%s0 + $0x18] sm:$0xff]
    %v54 = vld [vmem:[%s0 + $0x20] sm:$0xff]
    %v55 = vld [vmem:[%s0 + $0x28] sm:$0xff]
    %v56 = vld [vmem:[%s0 + $0x30] sm:$0xff]
    %v57 = vld [vmem:[%s0 + $0x38] sm:$0xff]
    %v58 = vld [vmem:[%s0 + $0x40] sm:$0xff]
    %v59 = vld [vmem:[%s0 + $0x48] sm:$0xff]
    %v60 = vld [vmem:[%s0 + $0x50] sm:$0xff]
    %v61 = vld [vmem:[%s0 + $0x58] sm:$0xff]
    %v62 = vld [vmem:[%s0 + $0x60] sm:$0xff]
    %v63 = vld [vmem:[%s0 + $0x68] sm:$0xff]
    %v64 = vld [vmem:[%s0 + $0x70] sm:$0xff]
    %v65 = vld [vmem:[%s0 + $0x78] sm:$0xff]
    %v66 = vld [vmem:[%s1] sm:$0xff]
    %v67 = vld [vmem:[%s1 + $0x8] sm:$0xff]
    %v68 = vld [vmem:[%s1 + $0x10] sm:$0xff]
    %v69 = vld [vmem:[%s1 + $0x18] sm:$0xff]
    %v70 = vld [vmem:[%s1 + $0x20] sm:$0xff]
    %v71 = vld [vmem:[%s1 + $0x28] sm:$0xff]
    %v72 = vld [vmem:[%s1 + $0x30] sm:$0xff]
    %v73 = vld [vmem:[%s1 + $0x38] sm:$0xff]
    %v74 = vld [vmem:[%s1 + $0x40] sm:$0xff]
    %v75 = vld [vmem:[%s1 + $0x48] sm:$0xff]
    %v76 = vld [vmem:[%s1 + $0x50] sm:$0xff]
    %v77 = vld [vmem:[%s1 + $0x58] sm:$0xff]
    %v78 = vld [vmem:[%s1 + $0x60] sm:$0xff]
    %v79 = vld [vmem:[%s1 + $0x68] sm:$0xff]
    %v80 = vld [vmem:[%s1 + $0x70] sm:$0xff]
    %v81 = vld [vmem:[%s1 + $0x78] sm:$0xff]
    %82 = vmatprep.subr.mxu0 0.0
    %83 = vmatpush1.msra.mxu0 %v66
    %84 = vmatprep.subr.mxu0 0.0
    %85 = vmatpush1.msra.mxu0 %v67
    %86 = vmatprep.subr.mxu0 0.0
    %87 = vmatpush1.msra.mxu0 %v68
    %88 = vmatprep.subr.mxu0 0.0
    %89 = vmatpush1.msra.mxu0 %v69
    %90 = vmatprep.subr.mxu0 0.0
    %91 = vmatpush1.msra.mxu0 %v70
    %92 = vmatprep.subr.mxu0 0.0
    %93 = vmatpush1.msra.mxu0 %v71
    %94 = vmatprep.subr.mxu0 0.0
    %95 = vmatpush1.msra.mxu0 %v72
    %96 = vmatprep.subr.mxu0 0.0
    %97 = vmatpush1.msra.mxu0 %v73
    %98 = vmatprep.subr.mxu0 0.0
    %99 = vmatpush1.msra.mxu0 %v74
    %100 = vmatprep.subr.mxu0 0.0
    %101 = vmatpush1.msra.mxu0 %v75
    %102 = vmatprep.subr.mxu0 0.0
    %103 = vmatpush1.msra.mxu0 %v76
    %104 = vmatprep.subr.mxu0 0.0
    %105 = vmatpush1.msra.mxu0 %v77
    %106 = vmatprep.subr.mxu0 0.0
    %107 = vmatpush1.msra.mxu0 %v78
    %108 = vmatprep.subr.mxu0 0.0
    %109 = vmatpush1.msra.mxu0 %v79
    %110 = vmatprep.subr.mxu0 0.0
    %111 = vmatpush1.msra.mxu0 %v80
    %112 = vmatprep.subr.mxu0 0.0
    %113 = vmatpush1.msra.mxu0 %v81
    %114 = vmatprep.subr.mxu0 0.0
    %115 = vmatpush1.msra.mxu0 0.0
    %116 = vmatprep.subr.mxu0 0.0
    %117 = vmatpush1.msra.mxu0 0.0
    %118 = vmatprep.subr.mxu0 0.0
    %119 = vmatpush1.msra.mxu0 0.0
    %120 = vmatprep.subr.mxu0 0.0
    %121 = vmatpush1.msra.mxu0 0.0
    %122 = vmatprep.subr.mxu0 0.0
    %123 = vmatpush1.msra.mxu0 0.0
    %124 = vmatprep.subr.mxu0 0.0
    %125 = vmatpush1.msra.mxu0 0.0
    %126 = vmatprep.subr.mxu0 0.0
    %127 = vmatpush1.msra.mxu0 0.0
    %128 = vmatprep.subr.mxu0 0.0
    %129 = vmatpush1.msra.mxu0 0.0
    %130 = vmatprep.subr.mxu0 0.0
    %131 = vmatpush1.msra.mxu0 0.0
    %132 = vmatprep.subr.mxu0 0.0
    %133 = vmatpush1.msra.mxu0 0.0
    %134 = vmatprep.subr.mxu0 0.0
    %135 = vmatpush1.msra.mxu0 0.0
    %136 = vmatprep.subr.mxu0 0.0
    %137 = vmatpush1.msra.mxu0 0.0
    %138 = vmatprep.subr.mxu0 0.0
    %139 = vmatpush1.msra.mxu0 0.0
    %140 = vmatprep.subr.mxu0 0.0
    %141 = vmatpush1.msra.mxu0 0.0
    %142 = vmatprep.subr.mxu0 0.0
    %143 = vmatpush1.msra.mxu0 0.0
    %144 = vmatprep.subr.mxu0 0.0
    %145 = vmatpush1.msra.mxu0 0.0
    %146 = vmatprep.mubr.f32.mxu0 0.0
    %147 = vmatmul.mubr.f32.gmra.mrb[0].mxu0 %v50
    %v148 = vpop.f32.mrb[0].mxu0
    %v149 = vadd.f32 0.0, %v148
    %v150 = vpop.f32.mrb[0].mxu0
    %151 = vmatprep.mubr.f32.mxu0 0.0
    %152 = vmatmul.mubr.f32.gmra.mrb[0].mxu0 %v51
    %v153 = vpop.f32.mrb[0].mxu0
    %v154 = vadd.f32 0.0, %v153
    %v155 = vpop.f32.mrb[0].mxu0
    %156 = vmatprep.mubr.f32.mxu0 0.0
    %157 = vmatmul.mubr.f32.gmra.mrb[0].mxu0 %v52
    %v158 = vpop.f32.mrb[0].mxu0
    %v159 = vadd.f32 0.0, %v158
    %v160 = vpop.f32.mrb[0].mxu0
    %161 = vmatprep.mubr.f32.mxu0 0.0
    %162 = vmatmul.mubr.f32.gmra.mrb[0].mxu0 %v53
    %v163 = vpop.f32.mrb[0].mxu0
    %v164 = vadd.f32 0.0, %v163
    %v165 = vpop.f32.mrb[0].mxu0
    %166 = vmatprep.mubr.f32.mxu0 0.0
    %167 = vmatmul.mubr.f32.gmra.mrb[0].mxu0 %v54
    %v168 = vpop.f32.mrb[0].mxu0
    %v169 = vadd.f32 0.0, %v168
    %v170 = vpop.f32.mrb[0].mxu0
    %171 = vmatprep.mubr.f32.mxu0 0.0
    %172 = vmatmul.mubr.f32.gmra.mrb[0].mxu0 %v55
    %v173 = vpop.f32.mrb[0].mxu0
    %v174 = vadd.f32 0.0, %v173
    %v175 = vpop.f32.mrb[0].mxu0
    %176 = vmatprep.mubr.f32.mxu0 0.0
    %177 = vmatmul.mubr.f32.gmra.mrb[0].mxu0 %v56
    %v178 = vpop.f32.mrb[0].mxu0
    %v179 = vadd.f32 0.0, %v178
    %v180 = vpop.f32.mrb[0].mxu0
    %181 = vmatprep.mubr.f32.mxu0 0.0
    %182 = vmatmul.mubr.f32.gmra.mrb[0].mxu0 %v57
    %v183 = vpop.f32.mrb[0].mxu0
    %v184 = vadd.f32 0.0, %v183
    %v185 = vpop.f32.mrb[0].mxu0
    %186 = vmatprep.mubr.f32.mxu0 0.0
    %187 = vmatmul.mubr.f32.gmra.mrb[0].mxu0 %v58
    %v188 = vpop.f32.mrb[0].mxu0
    %v189 = vadd.f32 0.0, %v188
    %v190 = vpop.f32.mrb[0].mxu0
    %191 = vmatprep.mubr.f32.mxu0 0.0
    %192 = vmatmul.mubr.f32.gmra.mrb[0].mxu0 %v59
    %v193 = vpop.f32.mrb[0].mxu0
    %v194 = vadd.f32 0.0, %v193
    %v195 = vpop.f32.mrb[0].mxu0
    %196 = vmatprep.mubr.f32.mxu0 0.0
    %197 = vmatmul.mubr.f32.gmra.mrb[0].mxu0 %v60
    %v198 = vpop.f32.mrb[0].mxu0
    %v199 = vadd.f32 0.0, %v198
    %v200 = vpop.f32.mrb[0].mxu0
    %201 = vmatprep.mubr.f32.mxu0 0.0
    %202 = vmatmul.mubr.f32.gmra.mrb[0].mxu0 %v61
    %v203 = vpop.f32.mrb[0].mxu0
    %v204 = vadd.f32 0.0, %v203
    %v205 = vpop.f32.mrb[0].mxu0
    %206 = vmatprep.mubr.f32.mxu0 0.0
    %207 = vmatmul.mubr.f32.gmra.mrb[0].mxu0 %v62
    %v208 = vpop.f32.mrb[0].mxu0
    %v209 = vadd.f32 0.0, %v208
    %v210 = vpop.f32.mrb[0].mxu0
    %211 = vmatprep.mubr.f32.mxu0 0.0
    %212 = vmatmul.mubr.f32.gmra.mrb[0].mxu0 %v63
    %v213 = vpop.f32.mrb[0].mxu0
    %v214 = vadd.f32 0.0, %v213
    %v215 = vpop.f32.mrb[0].mxu0
    %216 = vmatprep.mubr.f32.mxu0 0.0
    %217 = vmatmul.mubr.f32.gmra.mrb[0].mxu0 %v64
    %v218 = vpop.f32.mrb[0].mxu0
    %v219 = vadd.f32 0.0, %v218
    %v220 = vpop.f32.mrb[0].mxu0
    %221 = vmatprep.mubr.f32.mxu0 0.0
    %222 = vmatmul.mubr.f32.gmra.mrb[0].mxu0 %v65
    %v223 = vpop.f32.mrb[0].mxu0
    %v224 = vadd.f32 0.0, %v223
    %v225 = vpop.f32.mrb[0].mxu0
    %226 = vdwg.mxu0
    %v227 = vld [vmem:[%s2] sm:$0x1]
    %v229 = vlaneseq
    %v230 = vshrl.u32 %v229, 7
    %v231 = vsub.s32 0, %v230
    %v232 = vrot.slane %v227, %v231
    %v234 = vmul.f32 %v149, %v232
    %v235 = vmul.f32 %v154, %v232
    %v236 = vmul.f32 %v159, %v232
    %v237 = vmul.f32 %v164, %v232
    %v238 = vmul.f32 %v169, %v232
    %v239 = vmul.f32 %v174, %v232
    %v240 = vmul.f32 %v179, %v232
    %v241 = vmul.f32 %v184, %v232
    %v242 = vmul.f32 %v189, %v232
    %v243 = vmul.f32 %v194, %v232
    %v244 = vmul.f32 %v199, %v232
    %v245 = vmul.f32 %v204, %v232
    %v246 = vmul.f32 %v209, %v232
    %v247 = vmul.f32 %v214, %v232
    %v248 = vmul.f32 %v219, %v232
    %v249 = vmul.f32 %v224, %v232
    %v250 = vld [vmem:[%s3] sm:$0x1]
    %v252 = vlaneseq
    %v253 = vshrl.u32 %v252, 7
    %v254 = vsub.s32 0, %v253
    %v255 = vrot.slane %v250, %v254
    %v257 = vadd.f32 %v234, %v255
    %v258 = vadd.f32 %v235, %v255
    %v259 = vadd.f32 %v236, %v255
    %v260 = vadd.f32 %v237, %v255
    %v261 = vadd.f32 %v238, %v255
    %v262 = vadd.f32 %v239, %v255
    %v263 = vadd.f32 %v240, %v255
    %v264 = vadd.f32 %v241, %v255
    %v265 = vadd.f32 %v242, %v255
    %v266 = vadd.f32 %v243, %v255
    %v267 = vadd.f32 %v244, %v255
    %v268 = vadd.f32 %v245, %v255
    %v269 = vadd.f32 %v246, %v255
    %v270 = vadd.f32 %v247, %v255
    %v271 = vadd.f32 %v248, %v255
    %v272 = vadd.f32 %v249, %v255
    %v273 = vmax.f32 %v257, 0.0
    %v274 = vmax.f32 %v258, 0.0
    %v275 = vmax.f32 %v259, 0.0
    %v276 = vmax.f32 %v260, 0.0
    %v277 = vmax.f32 %v261, 0.0
    %v278 = vmax.f32 %v262, 0.0
    %v279 = vmax.f32 %v263, 0.0
    %v280 = vmax.f32 %v264, 0.0
    %v281 = vmax.f32 %v265, 0.0
    %v282 = vmax.f32 %v266, 0.0
    %v283 = vmax.f32 %v267, 0.0
    %v284 = vmax.f32 %v268, 0.0
    %v285 = vmax.f32 %v269, 0.0
    %v286 = vmax.f32 %v270, 0.0
    %v287 = vmax.f32 %v271, 0.0
    %v288 = vmax.f32 %v272, 0.0
    %v305 = vrot.slane %v273, 7
    %v306 = vrot.slane %v274, 7
    %v307 = vrot.slane %v275, 7
    %v308 = vrot.slane %v276, 7
    %v309 = vrot.slane %v277, 7
    %v310 = vrot.slane %v278, 7
    %v311 = vrot.slane %v279, 7
    %v312 = vrot.slane %v280, 7
    %v313 = vrot.slane %v281, 7
    %v314 = vrot.slane %v282, 7
    %v315 = vrot.slane %v283, 7
    %v316 = vrot.slane %v284, 7
    %v317 = vrot.slane %v285, 7
    %v318 = vrot.slane %v286, 7
    %v319 = vrot.slane %v287, 7
    %v320 = vrot.slane %v288, 7
    %vm337 = vcmask 1040384
    %v338 = vsel %vm337, 0.0, %v305
    %v339 = vsel %vm337, 0.0, %v306
    %v340 = vsel %vm337, 0.0, %v307
    %v341 = vsel %vm337, 0.0, %v308
    %v342 = vsel %vm337, 0.0, %v309
    %v343 = vsel %vm337, 0.0, %v310
    %v344 = vsel %vm337, 0.0, %v311
    %v345 = vsel %vm337, 0.0, %v312
    %v346 = vsel %vm337, 0.0, %v313
    %v347 = vsel %vm337, 0.0, %v314
    %v348 = vsel %vm337, 0.0, %v315
    %v349 = vsel %vm337, 0.0, %v316
    %v350 = vsel %vm337, 0.0, %v317
    %v351 = vsel %vm337, 0.0, %v318
    %v352 = vsel %vm337, 0.0, %v319
    %v353 = vsel %vm337, 0.0, %v320
    %v354 = vsel %vm337, %v305, 0.0
    %v355 = vsel %vm337, %v306, 0.0
    %v356 = vsel %vm337, %v307, 0.0
    %v357 = vsel %vm337, %v308, 0.0
    %v358 = vsel %vm337, %v309, 0.0
    %v359 = vsel %vm337, %v310, 0.0
    %v360 = vsel %vm337, %v311, 0.0
    %v361 = vsel %vm337, %v312, 0.0
    %v362 = vsel %vm337, %v313, 0.0
    %v363 = vsel %vm337, %v314, 0.0
    %v364 = vsel %vm337, %v315, 0.0
    %v365 = vsel %vm337, %v316, 0.0
    %v366 = vsel %vm337, %v317, 0.0
    %v367 = vsel %vm337, %v318, 0.0
    %v368 = vsel %vm337, %v319, 0.0
    %v369 = vsel %vm337, %v320, 0.0
    %vm399 = vcmask 1046528
    %v400 = vrot.slane 0.0, 1
    %v401 = vsel %vm399, %v400, %v400
    %v402 = vrot.slane %v338, 1
    %v403 = vrot.slane %v354, 1
    %v404 = vsel %vm399, %v402, %v403
    %v405 = vrot.slane %v339, 1
    %v406 = vrot.slane %v355, 1
    %v407 = vsel %vm399, %v405, %v406
    %v408 = vrot.slane %v340, 1
    %v409 = vrot.slane %v356, 1
    %v410 = vsel %vm399, %v408, %v409
    %v411 = vrot.slane %v341, 1
    %v412 = vrot.slane %v357, 1
    %v413 = vsel %vm399, %v411, %v412
    %v414 = vrot.slane %v342, 1
    %v415 = vrot.slane %v358, 1
    %v416 = vsel %vm399, %v414, %v415
    %v417 = vrot.slane %v343, 1
    %v418 = vrot.slane %v359, 1
    %v419 = vsel %vm399, %v417, %v418
    %v420 = vrot.slane %v344, 1
    %v421 = vrot.slane %v360, 1
    %v422 = vsel %vm399, %v420, %v421
    %v423 = vrot.slane %v346, 1
    %v424 = vrot.slane %v362, 1
    %v425 = vsel %vm399, %v423, %v424
    %v426 = vrot.slane %v347, 1
    %v427 = vrot.slane %v363, 1
    %v428 = vsel %vm399, %v426, %v427
    %v429 = vrot.slane %v348, 1
    %v430 = vrot.slane %v364, 1
    %v431 = vsel %vm399, %v429, %v430
    %v432 = vrot.slane %v349, 1
    %v433 = vrot.slane %v365, 1
    %v434 = vsel %vm399, %v432, %v433
    %v435 = vrot.slane %v350, 1
    %v436 = vrot.slane %v366, 1
    %v437 = vsel %vm399, %v435, %v436
    %v438 = vrot.slane %v351, 1
    %v439 = vrot.slane %v367, 1
    %v440 = vsel %vm399, %v438, %v439
    %v441 = vrot.slane %v352, 1
    %v442 = vrot.slane %v368, 1
    %v443 = vsel %vm399, %v441, %v442
    %444 = vrot.lane.b32.xlu0 %v401, 32
    %v445 = vpop.permute.xlu0 %444
    %446 = vrot.lane.b32.xlu0 %v404, 32
    %v447 = vpop.permute.xlu0 %446
    %448 = vrot.lane.b32.xlu0 %v407, 32
    %v449 = vpop.permute.xlu0 %448
    %450 = vrot.lane.b32.xlu0 %v410, 32
    %v451 = vpop.permute.xlu0 %450
    %452 = vrot.lane.b32.xlu0 %v413, 32
    %v453 = vpop.permute.xlu0 %452
    %454 = vrot.lane.b32.xlu0 %v416, 32
    %v455 = vpop.permute.xlu0 %454
    %456 = vrot.lane.b32.xlu0 %v419, 32
    %v457 = vpop.permute.xlu0 %456
    %458 = vrot.lane.b32.xlu0 %v422, 32
    %v459 = vpop.permute.xlu0 %458
    %460 = vrot.lane.b32.xlu0 %v425, 32
    %v461 = vpop.permute.xlu0 %460
    %462 = vrot.lane.b32.xlu0 %v428, 32
    %v463 = vpop.permute.xlu0 %462
    %464 = vrot.lane.b32.xlu0 %v431, 32
    %v465 = vpop.permute.xlu0 %464
    %466 = vrot.lane.b32.xlu0 %v434, 32
    %v467 = vpop.permute.xlu0 %466
    %468 = vrot.lane.b32.xlu0 %v437, 32
    %v469 = vpop.permute.xlu0 %468
    %470 = vrot.lane.b32.xlu0 %v440, 32
    %v471 = vpop.permute.xlu0 %470
    %472 = vrot.lane.b32.xlu0 %v443, 32
    %v473 = vpop.permute.xlu0 %472
    %vm489 = vcmask 1045504
    %v490 = vrot.slane 0.0, 2
    %v491 = vsel %vm489, %v490, %v490
    %v492 = vrot.slane %v338, 2
    %v493 = vrot.slane %v354, 2
    %v494 = vsel %vm489, %v492, %v493
    %v495 = vrot.slane %v339, 2
    %v496 = vrot.slane %v355, 2
    %v497 = vsel %vm489, %v495, %v496
    %v498 = vrot.slane %v340, 2
    %v499 = vrot.slane %v356, 2
    %v500 = vsel %vm489, %v498, %v499
    %v501 = vrot.slane %v341, 2
    %v502 = vrot.slane %v357, 2
    %v503 = vsel %vm489, %v501, %v502
    %v504 = vrot.slane %v342, 2
    %v505 = vrot.slane %v358, 2
    %v506 = vsel %vm489, %v504, %v505
    %v507 = vrot.slane %v343, 2
    %v508 = vrot.slane %v359, 2
    %v509 = vsel %vm489, %v507, %v508
    %v510 = vrot.slane %v344, 2
    %v511 = vrot.slane %v360, 2
    %v512 = vsel %vm489, %v510, %v511
    %v513 = vrot.slane %v346, 2
    %v514 = vrot.slane %v362, 2
    %v515 = vsel %vm489, %v513, %v514
    %v516 = vrot.slane %v347, 2
    %v517 = vrot.slane %v363, 2
    %v518 = vsel %vm489, %v516, %v517
    %v519 = vrot.slane %v348, 2
    %v520 = vrot.slane %v364, 2
    %v521 = vsel %vm489, %v519, %v520
    %v522 = vrot.slane %v349, 2
    %v523 = vrot.slane %v365, 2
    %v524 = vsel %vm489, %v522, %v523
    %v525 = vrot.slane %v350, 2
    %v526 = vrot.slane %v366, 2
    %v527 = vsel %vm489, %v525, %v526
    %v528 = vrot.slane %v351, 2
    %v529 = vrot.slane %v367, 2
    %v530 = vsel %vm489, %v528, %v529
    %v531 = vrot.slane %v352, 2
    %v532 = vrot.slane %v368, 2
    %v533 = vsel %vm489, %v531, %v532
    %534 = vrot.lane.b32.xlu0 %v491, 64
    %v535 = vpop.permute.xlu0 %534
    %536 = vrot.lane.b32.xlu0 %v494, 64
    %v537 = vpop.permute.xlu0 %536
    %538 = vrot.lane.b32.xlu0 %v497, 64
    %v539 = vpop.permute.xlu0 %538
    %540 = vrot.lane.b32.xlu0 %v500, 64
    %v541 = vpop.permute.xlu0 %540
    %542 = vrot.lane.b32.xlu0 %v503, 64
    %v543 = vpop.permute.xlu0 %542
    %544 = vrot.lane.b32.xlu0 %v506, 64
    %v545 = vpop.permute.xlu0 %544
    %546 = vrot.lane.b32.xlu0 %v509, 64
    %v547 = vpop.permute.xlu0 %546
    %548 = vrot.lane.b32.xlu0 %v512, 64
    %v549 = vpop.permute.xlu0 %548
    %550 = vrot.lane.b32.xlu0 %v515, 64
    %v551 = vpop.permute.xlu0 %550
    %552 = vrot.lane.b32.xlu0 %v518, 64
    %v553 = vpop.permute.xlu0 %552
    %554 = vrot.lane.b32.xlu0 %v521, 64
    %v555 = vpop.permute.xlu0 %554
    %556 = vrot.lane.b32.xlu0 %v524, 64
    %v557 = vpop.permute.xlu0 %556
    %558 = vrot.lane.b32.xlu0 %v527, 64
    %v559 = vpop.permute.xlu0 %558
    %560 = vrot.lane.b32.xlu0 %v530, 64
    %v561 = vpop.permute.xlu0 %560
    %562 = vrot.lane.b32.xlu0 %v533, 64
    %v563 = vpop.permute.xlu0 %562
    %581 = vrot.lane.b32.xlu0 %v338, 96
    %v582 = vpop.permute.xlu0 %581
    %583 = vrot.lane.b32.xlu0 %v339, 96
    %v584 = vpop.permute.xlu0 %583
    %585 = vrot.lane.b32.xlu0 %v340, 96
    %v586 = vpop.permute.xlu0 %585
    %587 = vrot.lane.b32.xlu0 %v341, 96
    %v588 = vpop.permute.xlu0 %587
    %589 = vrot.lane.b32.xlu0 %v342, 96
    %v590 = vpop.permute.xlu0 %589
    %591 = vrot.lane.b32.xlu0 %v343, 96
    %v592 = vpop.permute.xlu0 %591
    %593 = vrot.lane.b32.xlu0 %v344, 96
    %v594 = vpop.permute.xlu0 %593
    %595 = vrot.lane.b32.xlu0 %v345, 96
    %v596 = vpop.permute.xlu0 %595
    %597 = vrot.lane.b32.xlu0 %v346, 96
    %v598 = vpop.permute.xlu0 %597
    %599 = vrot.lane.b32.xlu0 %v347, 96
    %v600 = vpop.permute.xlu0 %599
    %601 = vrot.lane.b32.xlu0 %v348, 96
    %v602 = vpop.permute.xlu0 %601
    %603 = vrot.lane.b32.xlu0 %v349, 96
    %v604 = vpop.permute.xlu0 %603
    %605 = vrot.lane.b32.xlu0 %v350, 96
    %v606 = vpop.permute.xlu0 %605
    %607 = vrot.lane.b32.xlu0 %v351, 96
    %v608 = vpop.permute.xlu0 %607
    %609 = vrot.lane.b32.xlu0 %v352, 96
    %v610 = vpop.permute.xlu0 %609
    %611 = vrot.lane.b32.xlu0 %v353, 96
    %v612 = vpop.permute.xlu0 %611
    %v631 = vrot.slane %v345, 1
    %v632 = vrot.slane %v361, 1
    %v633 = vsel %vm399, %v631, %v632
    %v634 = vrot.slane %v353, 1
    %v635 = vrot.slane %v369, 1
    %v636 = vsel %vm399, %v634, %v635
    %v653 = vrot.slane %v345, 2
    %v654 = vrot.slane %v361, 2
    %v655 = vsel %vm489, %v653, %v654
    %v656 = vrot.slane %v353, 2
    %v657 = vrot.slane %v369, 2
    %v658 = vsel %vm489, %v656, %v657
    %659 = vrot.lane.b32.xlu0 %v494, 32
    %v660 = vpop.permute.xlu0 %659
    %661 = vrot.lane.b32.xlu0 %v497, 32
    %v662 = vpop.permute.xlu0 %661
    %663 = vrot.lane.b32.xlu0 %v500, 32
    %v664 = vpop.permute.xlu0 %663
    %665 = vrot.lane.b32.xlu0 %v503, 32
    %v666 = vpop.permute.xlu0 %665
    %667 = vrot.lane.b32.xlu0 %v506, 32
    %v668 = vpop.permute.xlu0 %667
    %669 = vrot.lane.b32.xlu0 %v509, 32
    %v670 = vpop.permute.xlu0 %669
    %671 = vrot.lane.b32.xlu0 %v512, 32
    %v672 = vpop.permute.xlu0 %671
    %673 = vrot.lane.b32.xlu0 %v655, 32
    %v674 = vpop.permute.xlu0 %673
    %675 = vrot.lane.b32.xlu0 %v515, 32
    %v676 = vpop.permute.xlu0 %675
    %677 = vrot.lane.b32.xlu0 %v518, 32
    %v678 = vpop.permute.xlu0 %677
    %679 = vrot.lane.b32.xlu0 %v521, 32
    %v680 = vpop.permute.xlu0 %679
    %681 = vrot.lane.b32.xlu0 %v524, 32
    %v682 = vpop.permute.xlu0 %681
    %683 = vrot.lane.b32.xlu0 %v527, 32
    %v684 = vpop.permute.xlu0 %683
    %685 = vrot.lane.b32.xlu0 %v530, 32
    %v686 = vpop.permute.xlu0 %685
    %687 = vrot.lane.b32.xlu0 %v533, 32
    %v688 = vpop.permute.xlu0 %687
    %689 = vrot.lane.b32.xlu0 %v658, 32
    %v690 = vpop.permute.xlu0 %689
    %707 = vrot.lane.b32.xlu0 %v339, 64
    %v708 = vpop.permute.xlu0 %707
    %709 = vrot.lane.b32.xlu0 %v340, 64
    %v710 = vpop.permute.xlu0 %709
    %711 = vrot.lane.b32.xlu0 %v341, 64
    %v712 = vpop.permute.xlu0 %711
    %713 = vrot.lane.b32.xlu0 %v342, 64
    %v714 = vpop.permute.xlu0 %713
    %715 = vrot.lane.b32.xlu0 %v343, 64
    %v716 = vpop.permute.xlu0 %715
    %717 = vrot.lane.b32.xlu0 %v344, 64
    %v718 = vpop.permute.xlu0 %717
    %719 = vrot.lane.b32.xlu0 %v345, 64
    %v720 = vpop.permute.xlu0 %719
    %721 = vrot.lane.b32.xlu0 0.0, 64
    %v722 = vpop.permute.xlu0 %721
    %723 = vrot.lane.b32.xlu0 %v347, 64
    %v724 = vpop.permute.xlu0 %723
    %725 = vrot.lane.b32.xlu0 %v348, 64
    %v726 = vpop.permute.xlu0 %725
    %727 = vrot.lane.b32.xlu0 %v349, 64
    %v728 = vpop.permute.xlu0 %727
    %729 = vrot.lane.b32.xlu0 %v350, 64
    %v730 = vpop.permute.xlu0 %729
    %731 = vrot.lane.b32.xlu0 %v351, 64
    %v732 = vpop.permute.xlu0 %731
    %733 = vrot.lane.b32.xlu0 %v352, 64
    %v734 = vpop.permute.xlu0 %733
    %735 = vrot.lane.b32.xlu0 %v353, 64
    %v736 = vpop.permute.xlu0 %735
    %752 = vrot.lane.b32.xlu0 %v407, 96
    %v753 = vpop.permute.xlu0 %752
    %754 = vrot.lane.b32.xlu0 %v410, 96
    %v755 = vpop.permute.xlu0 %754
    %756 = vrot.lane.b32.xlu0 %v413, 96
    %v757 = vpop.permute.xlu0 %756
    %758 = vrot.lane.b32.xlu0 %v416, 96
    %v759 = vpop.permute.xlu0 %758
    %760 = vrot.lane.b32.xlu0 %v419, 96
    %v761 = vpop.permute.xlu0 %760
    %762 = vrot.lane.b32.xlu0 %v422, 96
    %v763 = vpop.permute.xlu0 %762
    %764 = vrot.lane.b32.xlu0 %v633, 96
    %v765 = vpop.permute.xlu0 %764
    %766 = vrot.lane.b32.xlu0 %v401, 96
    %v767 = vpop.permute.xlu0 %766
    %768 = vrot.lane.b32.xlu0 %v428, 96
    %v769 = vpop.permute.xlu0 %768
    %770 = vrot.lane.b32.xlu0 %v431, 96
    %v771 = vpop.permute.xlu0 %770
    %772 = vrot.lane.b32.xlu0 %v434, 96
    %v773 = vpop.permute.xlu0 %772
    %774 = vrot.lane.b32.xlu0 %v437, 96
    %v775 = vpop.permute.xlu0 %774
    %776 = vrot.lane.b32.xlu0 %v440, 96
    %v777 = vpop.permute.xlu0 %776
    %778 = vrot.lane.b32.xlu0 %v443, 96
    %v779 = vpop.permute.xlu0 %778
    %780 = vrot.lane.b32.xlu0 %v636, 96
    %v781 = vpop.permute.xlu0 %780
    %vm797 = vcmask 261120
    %v798 = vsel %vm797, 0.0, %v445
    %v799 = vsel %vm797, %v338, %v447
    %v800 = vsel %vm797, %v339, %v449
    %v801 = vsel %vm797, %v340, %v451
    %v802 = vsel %vm797, %v341, %v453
    %v803 = vsel %vm797, %v342, %v455
    %v804 = vsel %vm797, %v343, %v457
    %v805 = vsel %vm797, %v344, %v459
    %v806 = vsel %vm797, %v346, %v461
    %v807 = vsel %vm797, %v347, %v463
    %v808 = vsel %vm797, %v348, %v465
    %v809 = vsel %vm797, %v349, %v467
    %v810 = vsel %vm797, %v350, %v469
    %v811 = vsel %vm797, %v351, %v471
    %v812 = vsel %vm797, %v352, %v473
    %vm813 = vcmask 523264
    %v814 = vsel %vm813, %v798, %v535
    %v815 = vsel %vm813, %v799, %v537
    %v816 = vsel %vm813, %v800, %v539
    %v817 = vsel %vm813, %v801, %v541
    %v818 = vsel %vm813, %v802, %v543
    %v819 = vsel %vm813, %v803, %v545
    %v820 = vsel %vm813, %v804, %v547
    %v821 = vsel %vm813, %v805, %v549
    %v822 = vsel %vm813, %v806, %v551
    %v823 = vsel %vm813, %v807, %v553
    %v824 = vsel %vm813, %v808, %v555
    %v825 = vsel %vm813, %v809, %v557
    %v826 = vsel %vm813, %v810, %v559
    %v827 = vsel %vm813, %v811, %v561
    %v828 = vsel %vm813, %v812, %v563
    %vm829 = vcmask 785408
    %v830 = vsel %vm829, %v814, %v582
    %v831 = vsel %vm829, %v815, %v584
    %v832 = vsel %vm829, %v816, %v586
    %v833 = vsel %vm829, %v817, %v588
    %v834 = vsel %vm829, %v818, %v590
    %v835 = vsel %vm829, %v819, %v592
    %v836 = vsel %vm829, %v820, %v594
    %v837 = vsel %vm829, %v821, %v596
    %v838 = vsel %vm829, %v814, %v598
    %v839 = vsel %vm829, %v822, %v600
    %v840 = vsel %vm829, %v823, %v602
    %v841 = vsel %vm829, %v824, %v604
    %v842 = vsel %vm829, %v825, %v606
    %v843 = vsel %vm829, %v826, %v608
    %v844 = vsel %vm829, %v827, %v610
    %v845 = vsel %vm829, %v828, %v612
    %v846 = vsel %vm797, %v404, %v660
    %v847 = vsel %vm797, %v407, %v662
    %v848 = vsel %vm797, %v410, %v664
    %v849 = vsel %vm797, %v413, %v666
    %v850 = vsel %vm797, %v416, %v668
    %v851 = vsel %vm797, %v419, %v670
    %v852 = vsel %vm797, %v422, %v672
    %v853 = vsel %vm797, %v633, %v674
    %v854 = vsel %vm797, %v425, %v676
    %v855 = vsel %vm797, %v428, %v678
    %v856 = vsel %vm797, %v431, %v680
    %v857 = vsel %vm797, %v434, %v682
    %v858 = vsel %vm797, %v437, %v684
    %v859 = vsel %vm797, %v440, %v686
    %v860 = vsel %vm797, %v443, %v688
    %v861 = vsel %vm797, %v636, %v690
    %v862 = vsel %vm813, %v846, %v708
    %v863 = vsel %vm813, %v847, %v710
    %v864 = vsel %vm813, %v848, %v712
    %v865 = vsel %vm813, %v849, %v714
    %v866 = vsel %vm813, %v850, %v716
    %v867 = vsel %vm813, %v851, %v718
    %v868 = vsel %vm813, %v852, %v720
    %v869 = vsel %vm813, %v853, %v722
    %v870 = vsel %vm813, %v854, %v724
    %v871 = vsel %vm813, %v855, %v726
    %v872 = vsel %vm813, %v856, %v728
    %v873 = vsel %vm813, %v857, %v730
    %v874 = vsel %vm813, %v858, %v732
    %v875 = vsel %vm813, %v859, %v734
    %v876 = vsel %vm813, %v860, %v736
    %v877 = vsel %vm813, %v861, %v722
    %v878 = vsel %vm829, %v862, %v753
    %v879 = vsel %vm829, %v863, %v755
    %v880 = vsel %vm829, %v864, %v757
    %v881 = vsel %vm829, %v865, %v759
    %v882 = vsel %vm829, %v866, %v761
    %v883 = vsel %vm829, %v867, %v763
    %v884 = vsel %vm829, %v868, %v765
    %v885 = vsel %vm829, %v869, %v767
    %v886 = vsel %vm829, %v870, %v769
    %v887 = vsel %vm829, %v871, %v771
    %v888 = vsel %vm829, %v872, %v773
    %v889 = vsel %vm829, %v873, %v775
    %v890 = vsel %vm829, %v874, %v777
    %v891 = vsel %vm829, %v875, %v779
    %v892 = vsel %vm829, %v876, %v781
    %v893 = vsel %vm829, %v877, %v767
    %v894 = vld [vmem:[#allocation2] sm:$0xff]
    %v895 = vld [vmem:[#allocation2 + $0x8] sm:$0xff]
    %v896 = vld [vmem:[#allocation2 + $0x10] sm:$0xff]
    %v897 = vld [vmem:[#allocation2 + $0x18] sm:$0xff]
    %v898 = vld [vmem:[#allocation2 + $0x20] sm:$0xff]
    %v899 = vld [vmem:[#allocation2 + $0x28] sm:$0xff]
    %v900 = vld [vmem:[#allocation2 + $0x30] sm:$0xff]
    %v901 = vld [vmem:[#allocation2 + $0x38] sm:$0xff]
    %v902 = vld [vmem:[#allocation2 + $0x40] sm:$0xff]
    %v903 = vld [vmem:[#allocation2 + $0x48] sm:$0xff]
    %v904 = vld [vmem:[#allocation2 + $0x50] sm:$0xff]
    %v905 = vld [vmem:[#allocation2 + $0x58] sm:$0xff]
    %v906 = vld [vmem:[#allocation2 + $0x60] sm:$0xff]
    %v907 = vld [vmem:[#allocation2 + $0x68] sm:$0xff]
    %v908 = vld [vmem:[#allocation2 + $0x70] sm:$0xff]
    %v909 = vld [vmem:[#allocation2 + $0x78] sm:$0xff]
    %v910 = vld [vmem:[#allocation2 + $0x80] sm:$0xff]
    %v911 = vld [vmem:[#allocation2 + $0x88] sm:$0xff]
    %v912 = vld [vmem:[#allocation2 + $0x90] sm:$0xff]
    %v913 = vld [vmem:[#allocation2 + $0x98] sm:$0xff]
    %v914 = vld [vmem:[#allocation2 + $0xa0] sm:$0xff]
    %v915 = vld [vmem:[#allocation2 + $0xa8] sm:$0xff]
    %v916 = vld [vmem:[#allocation2 + $0xb0] sm:$0xff]
    %v917 = vld [vmem:[#allocation2 + $0xb8] sm:$0xff]
    %v918 = vld [vmem:[#allocation2 + $0xc0] sm:$0xff]
    %v919 = vld [vmem:[#allocation2 + $0xc8] sm:$0xff]
    %v920 = vld [vmem:[#allocation2 + $0xd0] sm:$0xff]
    %v921 = vld [vmem:[#allocation2 + $0xd8] sm:$0xff]
    %v922 = vld [vmem:[#allocation2 + $0xe0] sm:$0xff]
    %v923 = vld [vmem:[#allocation2 + $0xe8] sm:$0xff]
    %v924 = vld [vmem:[#allocation2 + $0xf0] sm:$0xff]
    %v925 = vld [vmem:[#allocation2 + $0xf8] sm:$0xff]
    %v926 = vld [vmem:[#allocation2 + $0x100] sm:$0xff]
    %v927 = vld [vmem:[#allocation2 + $0x108] sm:$0xff]
    %v928 = vld [vmem:[#allocation2 + $0x110] sm:$0xff]
    %v929 = vld [vmem:[#allocation2 + $0x118] sm:$0xff]
    %v930 = vsel %vm797, %v497, 0
    %v932 = vsel %vm797, %v500, 0
    %v934 = vsel %vm797, %v503, 0
    %v936 = vsel %vm797, %v506, 0
    %v938 = vsel %vm797, %v509, 0
    %v940 = vsel %vm797, %v512, 0
    %v942 = vsel %vm797, %v655, 0
    %v944 = vsel %vm797, %v491, 0
    %v946 = vsel %vm797, %v518, 0
    %v948 = vsel %vm797, %v521, 0
    %v950 = vsel %vm797, %v524, 0
    %v952 = vsel %vm797, %v527, 0
    %v954 = vsel %vm797, %v530, 0
    %v956 = vsel %vm797, %v533, 0
    %v958 = vsel %vm797, %v658, 0
    %960 = vmatprep.subr.mxu0 0.0
    %961 = vmatpush1.msra.mxu0 %v894
    %962 = vmatprep.subr.mxu0 0.0
    %963 = vmatpush1.msra.mxu0 %v895
    %964 = vmatprep.subr.mxu0 0.0
    %965 = vmatpush1.msra.mxu0 %v896
    %966 = vmatprep.subr.mxu0 0.0
    %967 = vmatpush1.msra.mxu0 %v897
    %968 = vmatprep.subr.mxu0 0.0
    %969 = vmatpush1.msra.mxu0 %v898
    %970 = vmatprep.subr.mxu0 0.0
    %971 = vmatpush1.msra.mxu0 %v899
    %972 = vmatprep.subr.mxu0 0.0
    %973 = vmatpush1.msra.mxu0 %v900
    %974 = vmatprep.subr.mxu0 0.0
    %975 = vmatpush1.msra.mxu0 %v901
    %976 = vmatprep.subr.mxu0 0.0
    %977 = vmatpush1.msra.mxu0 %v902
    %978 = vmatprep.subr.mxu0 0.0
    %979 = vmatpush1.msra.mxu0 %v903
    %980 = vmatprep.subr.mxu0 0.0
    %981 = vmatpush1.msra.mxu0 %v904
    %982 = vmatprep.subr.mxu0 0.0
    %983 = vmatpush1.msra.mxu0 %v905
    %984 = vmatprep.subr.mxu0 0.0
    %985 = vmatpush1.msra.mxu0 %v906
    %986 = vmatprep.subr.mxu0 0.0
    %987 = vmatpush1.msra.mxu0 %v907
    %988 = vmatprep.subr.mxu0 0.0
    %989 = vmatpush1.msra.mxu0 %v908
    %990 = vmatprep.subr.mxu0 0.0
    %991 = vmatpush1.msra.mxu0 %v909
    %992 = vmatprep.subr.mxu0 0.0
    %993 = vmatpush1.msra.mxu0 %v910
    %994 = vmatprep.subr.mxu0 0.0
    %995 = vmatpush1.msra.mxu0 %v911
    %996 = vmatprep.subr.mxu0 0.0
    %997 = vmatpush1.msra.mxu0 %v912
    %998 = vmatprep.subr.mxu0 0.0
    %999 = vmatpush1.msra.mxu0 %v913
    %1000 = vmatprep.subr.mxu0 0.0
    %1001 = vmatpush1.msra.mxu0 %v914
    %1002 = vmatprep.subr.mxu0 0.0
    %1003 = vmatpush1.msra.mxu0 %v915
    %1004 = vmatprep.subr.mxu0 0.0
    %1005 = vmatpush1.msra.mxu0 %v916
    %1006 = vmatprep.subr.mxu0 0.0
    %1007 = vmatpush1.msra.mxu0 %v917
    %1008 = vmatprep.subr.mxu0 0.0
    %1009 = vmatpush1.msra.mxu0 %v918
    %1010 = vmatprep.subr.mxu0 0.0
    %1011 = vmatpush1.msra.mxu0 %v919
    %1012 = vmatprep.subr.mxu0 0.0
    %1013 = vmatpush1.msra.mxu0 %v920
    %1014 = vmatprep.subr.mxu0 0.0
    %1015 = vmatpush1.msra.mxu0 %v921
    %1016 = vmatprep.subr.mxu0 0.0
    %1017 = vmatpush1.msra.mxu0 %v922
    %1018 = vmatprep.subr.mxu0 0.0
    %1019 = vmatpush1.msra.mxu0 %v923
    %1020 = vmatprep.subr.mxu0 0.0
    %1021 = vmatpush1.msra.mxu0 %v924
    %1022 = vmatprep.subr.mxu0 0.0
    %1023 = vmatpush1.msra.mxu0 %v925
    %1024 = vmatprep.mubr.f32.mxu0 %v878
    %1025 = vmatmul.mubr.f32.gmra.mrb[0].mxu0 %v830
    %v1026 = vpop.f32.mrb[0].mxu0
    %v1027 = vadd.f32 0.0, %v1026
    %v1028 = vpop.f32.mrb[0].mxu0
    %1029 = vmatprep.mubr.f32.mxu0 %v879
    %1030 = vmatmul.mubr.f32.gmra.mrb[0].mxu0 %v831
    %v1031 = vpop.f32.mrb[0].mxu0
    %v1032 = vadd.f32 0.0, %v1031
    %v1033 = vpop.f32.mrb[0].mxu0
    %1034 = vmatprep.mubr.f32.mxu0 %v880
    %1035 = vmatmul.mubr.f32.gmra.mrb[0].mxu0 %v832
    %v1036 = vpop.f32.mrb[0].mxu0
    %v1037 = vadd.f32 0.0, %v1036
    %v1038 = vpop.f32.mrb[0].mxu0
    %1039 = vmatprep.mubr.f32.mxu0 %v881
    %1040 = vmatmul.mubr.f32.gmra.mrb[0].mxu0 %v833
    %v1041 = vpop.f32.mrb[0].mxu0
    %v1042 = vadd.f32 0.0, %v1041
    %v1043 = vpop.f32.mrb[0].mxu0
    %1044 = vmatprep.mubr.f32.mxu0 %v882
    %1045 = vmatmul.mubr.f32.gmra.mrb[0].mxu0 %v834
    %v1046 = vpop.f32.mrb[0].mxu0
    %v1047 = vadd.f32 0.0, %v1046
    %v1048 = vpop.f32.mrb[0].mxu0
    %1049 = vmatprep.mubr.f32.mxu0 %v883
    %1050 = vmatmul.mubr.f32.gmra.mrb[0].mxu0 %v835
    %v1051 = vpop.f32.mrb[0].mxu0
    %v1052 = vadd.f32 0.0, %v1051
    %v1053 = vpop.f32.mrb[0].mxu0
    %1054 = vmatprep.mubr.f32.mxu0 %v884
    %1055 = vmatmul.mubr.f32.gmra.mrb[0].mxu0 %v836
    %v1056 = vpop.f32.mrb[0].mxu0
    %v1057 = vadd.f32 0.0, %v1056
    %v1058 = vpop.f32.mrb[0].mxu0
    %1059 = vmatprep.mubr.f32.mxu0 %v885
    %1060 = vmatmul.mubr.f32.gmra.mrb[0].mxu0 %v837
    %v1061 = vpop.f32.mrb[0].mxu0
    %v1062 = vadd.f32 0.0, %v1061
    %v1063 = vpop.f32.mrb[0].mxu0
    %1064 = vmatprep.mubr.f32.mxu0 %v886
    %1065 = vmatmul.mubr.f32.gmra.mrb[0].mxu0 %v838
    %v1066 = vpop.f32.mrb[0].mxu0
    %v1067 = vadd.f32 0.0, %v1066
    %v1068 = vpop.f32.mrb[0].mxu0
    %1069 = vmatprep.mubr.f32.mxu0 %v887
    %1070 = vmatmul.mubr.f32.gmra.mrb[0].mxu0 %v839
    %v1071 = vpop.f32.mrb[0].mxu0
    %v1072 = vadd.f32 0.0, %v1071
    %v1073 = vpop.f32.mrb[0].mxu0
    %1074 = vmatprep.mubr.f32.mxu0 %v888
    %1075 = vmatmul.mubr.f32.gmra.mrb[0].mxu0 %v840
    %v1076 = vpop.f32.mrb[0].mxu0
    %v1077 = vadd.f32 0.0, %v1076
    %v1078 = vpop.f32.mrb[0].mxu0
    %1079 = vmatprep.mubr.f32.mxu0 %v889
    %1080 = vmatmul.mubr.f32.gmra.mrb[0].mxu0 %v841
    %v1081 = vpop.f32.mrb[0].mxu0
    %v1082 = vadd.f32 0.0, %v1081
    %v1083 = vpop.f32.mrb[0].mxu0
    %1084 = vmatprep.mubr.f32.mxu0 %v890
    %1085 = vmatmul.mubr.f32.gmra.mrb[0].mxu0 %v842
    %v1086 = vpop.f32.mrb[0].mxu0
    %v1087 = vadd.f32 0.0, %v1086
    %v1088 = vpop.f32.mrb[0].mxu0
    %1089 = vmatprep.mubr.f32.mxu0 %v891
    %1090 = vmatmul.mubr.f32.gmra.mrb[0].mxu0 %v843
    %v1091 = vpop.f32.mrb[0].mxu0
    %v1092 = vadd.f32 0.0, %v1091
    %v1093 = vpop.f32.mrb[0].mxu0
    %1094 = vmatprep.mubr.f32.mxu0 %v892
    %1095 = vmatmul.mubr.f32.gmra.mrb[0].mxu0 %v844
    %v1096 = vpop.f32.mrb[0].mxu0
    %v1097 = vadd.f32 0.0, %v1096
    %v1098 = vpop.f32.mrb[0].mxu0
    %1099 = vmatprep.mubr.f32.mxu0 %v893
    %1100 = vmatmul.mubr.f32.gmra.mrb[0].mxu0 %v845
    %v1101 = vpop.f32.mrb[0].mxu0
    %v1102 = vadd.f32 0.0, %v1101
    %v1103 = vpop.f32.mrb[0].mxu0
    %1104 = vdwg.mxu0
    %1105 = vmatprep.subr.mxu0 0.0
    %1106 = vmatpush1.msra.mxu0 %v926
    %1107 = vmatprep.subr.mxu0 0.0
    %1108 = vmatpush1.msra.mxu0 %v927
    %1109 = vmatprep.subr.mxu0 0.0
    %1110 = vmatpush1.msra.mxu0 %v928
    %1111 = vmatprep.subr.mxu0 0.0
    %1112 = vmatpush1.msra.mxu0 %v929
    %1113 = vmatprep.subr.mxu0 0.0
    %1114 = vmatpush1.msra.mxu0 0.0
    %1115 = vmatprep.subr.mxu0 0.0
    %1116 = vmatpush1.msra.mxu0 0.0
    %1117 = vmatprep.subr.mxu0 0.0
    %1118 = vmatpush1.msra.mxu0 0.0
    %1119 = vmatprep.subr.mxu0 0.0
    %1120 = vmatpush1.msra.mxu0 0.0
    %1121 = vmatprep.subr.mxu0 0.0
    %1122 = vmatpush1.msra.mxu0 0.0
    %1123 = vmatprep.subr.mxu0 0.0
    %1124 = vmatpush1.msra.mxu0 0.0
    %1125 = vmatprep.subr.mxu0 0.0
    %1126 = vmatpush1.msra.mxu0 0.0
    %1127 = vmatprep.subr.mxu0 0.0
    %1128 = vmatpush1.msra.mxu0 0.0
    %1129 = vmatprep.subr.mxu0 0.0
    %1130 = vmatpush1.msra.mxu0 0.0
    %1131 = vmatprep.subr.mxu0 0.0
    %1132 = vmatpush1.msra.mxu0 0.0
    %1133 = vmatprep.subr.mxu0 0.0
    %1134 = vmatpush1.msra.mxu0 0.0
    %1135 = vmatprep.subr.mxu0 0.0
    %1136 = vmatpush1.msra.mxu0 0.0
    %1137 = vmatprep.subr.mxu0 0.0
    %1138 = vmatpush1.msra.mxu0 0.0
    %1139 = vmatprep.subr.mxu0 0.0
    %1140 = vmatpush1.msra.mxu0 0.0
    %1141 = vmatprep.subr.mxu0 0.0
    %1142 = vmatpush1.msra.mxu0 0.0
    %1143 = vmatprep.subr.mxu0 0.0
    %1144 = vmatpush1.msra.mxu0 0.0
    %1145 = vmatprep.subr.mxu0 0.0
    %1146 = vmatpush1.msra.mxu0 0.0
    %1147 = vmatprep.subr.mxu0 0.0
    %1148 = vmatpush1.msra.mxu0 0.0
    %1149 = vmatprep.subr.mxu0 0.0
    %1150 = vmatpush1.msra.mxu0 0.0
    %1151 = vmatprep.subr.mxu0 0.0
    %1152 = vmatpush1.msra.mxu0 0.0
    %1153 = vmatprep.subr.mxu0 0.0
    %1154 = vmatpush1.msra.mxu0 0.0
    %1155 = vmatprep.subr.mxu0 0.0
    %1156 = vmatpush1.msra.mxu0 0.0
    %1157 = vmatprep.subr.mxu0 0.0
    %1158 = vmatpush1.msra.mxu0 0.0
    %1159 = vmatprep.subr.mxu0 0.0
    %1160 = vmatpush1.msra.mxu0 0.0
    %1161 = vmatprep.subr.mxu0 0.0
    %1162 = vmatpush1.msra.mxu0 0.0
    %1163 = vmatprep.subr.mxu0 0.0
    %1164 = vmatpush1.msra.mxu0 0.0
    %1165 = vmatprep.subr.mxu0 0.0
    %1166 = vmatpush1.msra.mxu0 0.0
    %1167 = vmatprep.subr.mxu0 0.0
    %1168 = vmatpush1.msra.mxu0 0.0
    %1169 = vmatprep.mubr.f32.mxu0 0.0
    %1170 = vmatmul.mubr.f32.gmra.mrb[0].mxu0 %v930
    %v1171 = vpop.f32.mrb[0].mxu0
    %v1172 = vadd.f32 %v1027, %v1171
    %v1173 = vpop.f32.mrb[0].mxu0
    %1174 = vmatprep.mubr.f32.mxu0 0.0
    %1175 = vmatmul.mubr.f32.gmra.mrb[0].mxu0 %v932
    %v1176 = vpop.f32.mrb[0].mxu0
    %v1177 = vadd.f32 %v1032, %v1176
    %v1178 = vpop.f32.mrb[0].mxu0
    %1179 = vmatprep.mubr.f32.mxu0 0.0
    %1180 = vmatmul.mubr.f32.gmra.mrb[0].mxu0 %v934
    %v1181 = vpop.f32.mrb[0].mxu0
    %v1182 = vadd.f32 %v1037, %v1181
    %v1183 = vpop.f32.mrb[0].mxu0
    %1184 = vmatprep.mubr.f32.mxu0 0.0
    %1185 = vmatmul.mubr.f32.gmra.mrb[0].mxu0 %v936
    %v1186 = vpop.f32.mrb[0].mxu0
    %v1187 = vadd.f32 %v1042, %v1186
    %v1188 = vpop.f32.mrb[0].mxu0
    %1189 = vmatprep.mubr.f32.mxu0 0.0
    %1190 = vmatmul.mubr.f32.gmra.mrb[0].mxu0 %v938
    %v1191 = vpop.f32.mrb[0].mxu0
    %v1192 = vadd.f32 %v1047, %v1191
    %v1193 = vpop.f32.mrb[0].mxu0
    %1194 = vmatprep.mubr.f32.mxu0 0.0
    %1195 = vmatmul.mubr.f32.gmra.mrb[0].mxu0 %v940
    %v1196 = vpop.f32.mrb[0].mxu0
    %v1197 = vadd.f32 %v1052, %v1196
    %v1198 = vpop.f32.mrb[0].mxu0
    %1199 = vmatprep.mubr.f32.mxu0 0.0
    %1200 = vmatmul.mubr.f32.gmra.mrb[0].mxu0 %v942
    %v1201 = vpop.f32.mrb[0].mxu0
    %v1202 = vadd.f32 %v1057, %v1201
    %v1203 = vpop.f32.mrb[0].mxu0
    %1204 = vmatprep.mubr.f32.mxu0 0.0
    %1205 = vmatmul.mubr.f32.gmra.mrb[0].mxu0 %v944
    %v1206 = vpop.f32.mrb[0].mxu0
    %v1207 = vadd.f32 %v1062, %v1206
    %v1208 = vpop.f32.mrb[0].mxu0
    %1209 = vmatprep.mubr.f32.mxu0 0.0
    %1210 = vmatmul.mubr.f32.gmra.mrb[0].mxu0 %v946
    %v1211 = vpop.f32.mrb[0].mxu0
    %v1212 = vadd.f32 %v1067, %v1211
    %v1213 = vpop.f32.mrb[0].mxu0
    %1214 = vmatprep.mubr.f32.mxu0 0.0
    %1215 = vmatmul.mubr.f32.gmra.mrb[0].mxu0 %v948
    %v1216 = vpop.f32.mrb[0].mxu0
    %v1217 = vadd.f32 %v1072, %v1216
    %v1218 = vpop.f32.mrb[0].mxu0
    %1219 = vmatprep.mubr.f32.mxu0 0.0
    %1220 = vmatmul.mubr.f32.gmra.mrb[0].mxu0 %v950
    %v1221 = vpop.f32.mrb[0].mxu0
    %v1222 = vadd.f32 %v1077, %v1221
    %v1223 = vpop.f32.mrb[0].mxu0
    %1224 = vmatprep.mubr.f32.mxu0 0.0
    %1225 = vmatmul.mubr.f32.gmra.mrb[0].mxu0 %v952
    %v1226 = vpop.f32.mrb[0].mxu0
    %v1227 = vadd.f32 %v1082, %v1226
    %v1228 = vpop.f32.mrb[0].mxu0
    %1229 = vmatprep.mubr.f32.mxu0 0.0
    %1230 = vmatmul.mubr.f32.gmra.mrb[0].mxu0 %v954
    %v1231 = vpop.f32.mrb[0].mxu0
    %v1232 = vadd.f32 %v1087, %v1231
    %v1233 = vpop.f32.mrb[0].mxu0
    %1234 = vmatprep.mubr.f32.mxu0 0.0
    %1235 = vmatmul.mubr.f32.gmra.mrb[0].mxu0 %v956
    %v1236 = vpop.f32.mrb[0].mxu0
    %v1237 = vadd.f32 %v1092, %v1236
    %v1238 = vpop.f32.mrb[0].mxu0
    %1239 = vmatprep.mubr.f32.mxu0 0.0
    %1240 = vmatmul.mubr.f32.gmra.mrb[0].mxu0 %v958
    %v1241 = vpop.f32.mrb[0].mxu0
    %v1242 = vadd.f32 %v1097, %v1241
    %v1243 = vpop.f32.mrb[0].mxu0
    %1244 = vmatprep.mubr.f32.mxu0 0.0
    %1245 = vmatmul.mubr.f32.gmra.mrb[0].mxu0 %v944
    %v1246 = vpop.f32.mrb[0].mxu0
    %v1247 = vadd.f32 %v1102, %v1246
    %v1248 = vpop.f32.mrb[0].mxu0
    %1249 = vdwg.mxu0
    %v1250 = vld [vmem:[%s5] sm:$0x1]
    %v1252 = vlaneseq
    %v1253 = vshrl.u32 %v1252, 7
    %v1254 = vsub.s32 0, %v1253
    %v1255 = vrot.slane %v1250, %v1254
    %v1257 = vmul.f32 %v1172, %v1255
    %v1258 = vmul.f32 %v1177, %v1255
    %v1259 = vmul.f32 %v1182, %v1255
    %v1260 = vmul.f32 %v1187, %v1255
    %v1261 = vmul.f32 %v1192, %v1255
    %v1262 = vmul.f32 %v1197, %v1255
    %v1263 = vmul.f32 %v1202, %v1255
    %v1264 = vmul.f32 %v1207, %v1255
    %v1265 = vmul.f32 %v1212, %v1255
    %v1266 = vmul.f32 %v1217, %v1255
    %v1267 = vmul.f32 %v1222, %v1255
    %v1268 = vmul.f32 %v1227, %v1255
    %v1269 = vmul.f32 %v1232, %v1255
    %v1270 = vmul.f32 %v1237, %v1255
    %v1271 = vmul.f32 %v1242, %v1255
    %v1272 = vmul.f32 %v1247, %v1255
    %v1273 = vld [vmem:[%s6] sm:$0x1]
    %v1275 = vlaneseq
    %v1276 = vshrl.u32 %v1275, 7
    %v1277 = vsub.s32 0, %v1276
    %v1278 = vrot.slane %v1273, %v1277
    %v1280 = vadd.f32 %v1257, %v1278
    %v1281 = vadd.f32 %v1258, %v1278
    %v1282 = vadd.f32 %v1259, %v1278
    %v1283 = vadd.f32 %v1260, %v1278
    %v1284 = vadd.f32 %v1261, %v1278
    %v1285 = vadd.f32 %v1262, %v1278
    %v1286 = vadd.f32 %v1263, %v1278
    %v1287 = vadd.f32 %v1264, %v1278
    %v1288 = vadd.f32 %v1265, %v1278
    %v1289 = vadd.f32 %v1266, %v1278
    %v1290 = vadd.f32 %v1267, %v1278
    %v1291 = vadd.f32 %v1268, %v1278
    %v1292 = vadd.f32 %v1269, %v1278
    %v1293 = vadd.f32 %v1270, %v1278
    %v1294 = vadd.f32 %v1271, %v1278
    %v1295 = vadd.f32 %v1272, %v1278
    %v1296 = vmax.f32 %v1280, 0.0
    %v1297 = vmax.f32 %v1281, 0.0
    %v1298 = vmax.f32 %v1282, 0.0
    %v1299 = vmax.f32 %v1283, 0.0
    %v1300 = vmax.f32 %v1284, 0.0
    %v1301 = vmax.f32 %v1285, 0.0
    %v1302 = vmax.f32 %v1286, 0.0
    %v1303 = vmax.f32 %v1287, 0.0
    %v1304 = vmax.f32 %v1288, 0.0
    %v1305 = vmax.f32 %v1289, 0.0
    %v1306 = vmax.f32 %v1290, 0.0
    %v1307 = vmax.f32 %v1291, 0.0
    %v1308 = vmax.f32 %v1292, 0.0
    %v1309 = vmax.f32 %v1293, 0.0
    %v1310 = vmax.f32 %v1294, 0.0
    %v1311 = vmax.f32 %v1295, 0.0
    %v1312 = vld [vmem:[%s7] sm:$0xff]
    %v1313 = vld [vmem:[%s7 + $0x8] sm:$0xff]
    %v1314 = vld [vmem:[%s7 + $0x10] sm:$0xff]
    %v1315 = vld [vmem:[%s7 + $0x18] sm:$0xff]
    %v1317 = vsel %vm797, %v1296, 0
    %v1320 = vsel %vm797, %v1297, 0
    %v1323 = vsel %vm797, %v1298, 0
    %v1326 = vsel %vm797, %v1299, 0
    %v1329 = vsel %vm797, %v1300, 0
    %v1332 = vsel %vm797, %v1301, 0
    %v1335 = vsel %vm797, %v1302, 0
    %v1338 = vsel %vm797, %v1303, 0
    %v1341 = vsel %vm797, %v1304, 0
    %v1344 = vsel %vm797, %v1305, 0
    %v1347 = vsel %vm797, %v1306, 0
    %v1350 = vsel %vm797, %v1307, 0
    %v1353 = vsel %vm797, %v1308, 0
    %v1356 = vsel %vm797, %v1309, 0
    %v1359 = vsel %vm797, %v1310, 0
    %v1362 = vsel %vm797, %v1311, 0
    %1364 = vmatprep.subr.mxu0 0.0
    %1365 = vmatpush1.msra.mxu0 %v1312
    %1366 = vmatprep.subr.mxu0 0.0
    %1367 = vmatpush1.msra.mxu0 %v1313
    %1368 = vmatprep.subr.mxu0 0.0
    %1369 = vmatpush1.msra.mxu0 %v1314
    %1370 = vmatprep.subr.mxu0 0.0
    %1371 = vmatpush1.msra.mxu0 %v1315
    %1372 = vmatprep.subr.mxu0 0.0
    %1373 = vmatpush1.msra.mxu0 0.0
    %1374 = vmatprep.subr.mxu0 0.0
    %1375 = vmatpush1.msra.mxu0 0.0
    %1376 = vmatprep.subr.mxu0 0.0
    %1377 = vmatpush1.msra.mxu0 0.0
    %1378 = vmatprep.subr.mxu0 0.0
    %1379 = vmatpush1.msra.mxu0 0.0
    %1380 = vmatprep.subr.mxu0 0.0
    %1381 = vmatpush1.msra.mxu0 0.0
    %1382 = vmatprep.subr.mxu0 0.0
    %1383 = vmatpush1.msra.mxu0 0.0
    %1384 = vmatprep.subr.mxu0 0.0
    %1385 = vmatpush1.msra.mxu0 0.0
    %1386 = vmatprep.subr.mxu0 0.0
    %1387 = vmatpush1.msra.mxu0 0.0
    %1388 = vmatprep.subr.mxu0 0.0
    %1389 = vmatpush1.msra.mxu0 0.0
    %1390 = vmatprep.subr.mxu0 0.0
    %1391 = vmatpush1.msra.mxu0 0.0
    %1392 = vmatprep.subr.mxu0 0.0
    %1393 = vmatpush1.msra.mxu0 0.0
    %1394 = vmatprep.subr.mxu0 0.0
    %1395 = vmatpush1.msra.mxu0 0.0
    %1396 = vmatprep.subr.mxu0 0.0
    %1397 = vmatpush1.msra.mxu0 0.0
    %1398 = vmatprep.subr.mxu0 0.0
    %1399 = vmatpush1.msra.mxu0 0.0
    %1400 = vmatprep.subr.mxu0 0.0
    %1401 = vmatpush1.msra.mxu0 0.0
    %1402 = vmatprep.subr.mxu0 0.0
    %1403 = vmatpush1.msra.mxu0 0.0
    %1404 = vmatprep.subr.mxu0 0.0
    %1405 = vmatpush1.msra.mxu0 0.0
    %1406 = vmatprep.subr.mxu0 0.0
    %1407 = vmatpush1.msra.mxu0 0.0
    %1408 = vmatprep.subr.mxu0 0.0
    %1409 = vmatpush1.msra.mxu0 0.0
    %1410 = vmatprep.subr.mxu0 0.0
    %1411 = vmatpush1.msra.mxu0 0.0
    %1412 = vmatprep.subr.mxu0 0.0
    %1413 = vmatpush1.msra.mxu0 0.0
    %1414 = vmatprep.subr.mxu0 0.0
    %1415 = vmatpush1.msra.mxu0 0.0
    %1416 = vmatprep.subr.mxu0 0.0
    %1417 = vmatpush1.msra.mxu0 0.0
    %1418 = vmatprep.subr.mxu0 0.0
    %1419 = vmatpush1.msra.mxu0 0.0
    %1420 = vmatprep.subr.mxu0 0.0
    %1421 = vmatpush1.msra.mxu0 0.0
    %1422 = vmatprep.subr.mxu0 0.0
    %1423 = vmatpush1.msra.mxu0 0.0
    %1424 = vmatprep.subr.mxu0 0.0
    %1425 = vmatpush1.msra.mxu0 0.0
    %1426 = vmatprep.subr.mxu0 0.0
    %1427 = vmatpush1.msra.mxu0 0.0
    %1428 = vmatprep.mubr.f32.mxu0 0.0
    %1429 = vmatmul.mubr.f32.gmra.mrb[0].mxu0 %v1317
    %v1430 = vpop.f32.mrb[0].mxu0
    %v1431 = vadd.f32 0.0, %v1430
    %v1432 = vpop.f32.mrb[0].mxu0
    %1433 = vmatprep.mubr.f32.mxu0 0.0
    %1434 = vmatmul.mubr.f32.gmra.mrb[0].mxu0 %v1320
    %v1435 = vpop.f32.mrb[0].mxu0
    %v1436 = vadd.f32 0.0, %v1435
    %v1437 = vpop.f32.mrb[0].mxu0
    %1438 = vmatprep.mubr.f32.mxu0 0.0
    %1439 = vmatmul.mubr.f32.gmra.mrb[0].mxu0 %v1323
    %v1440 = vpop.f32.mrb[0].mxu0
    %v1441 = vadd.f32 0.0, %v1440
    %v1442 = vpop.f32.mrb[0].mxu0
    %1443 = vmatprep.mubr.f32.mxu0 0.0
    %1444 = vmatmul.mubr.f32.gmra.mrb[0].mxu0 %v1326
    %v1445 = vpop.f32.mrb[0].mxu0
    %v1446 = vadd.f32 0.0, %v1445
    %v1447 = vpop.f32.mrb[0].mxu0
    %1448 = vmatprep.mubr.f32.mxu0 0.0
    %1449 = vmatmul.mubr.f32.gmra.mrb[0].mxu0 %v1329
    %v1450 = vpop.f32.mrb[0].mxu0
    %v1451 = vadd.f32 0.0, %v1450
    %v1452 = vpop.f32.mrb[0].mxu0
    %1453 = vmatprep.mubr.f32.mxu0 0.0
    %1454 = vmatmul.mubr.f32.gmra.mrb[0].mxu0 %v1332
    %v1455 = vpop.f32.mrb[0].mxu0
    %v1456 = vadd.f32 0.0, %v1455
    %v1457 = vpop.f32.mrb[0].mxu0
    %1458 = vmatprep.mubr.f32.mxu0 0.0
    %1459 = vmatmul.mubr.f32.gmra.mrb[0].mxu0 %v1335
    %v1460 = vpop.f32.mrb[0].mxu0
    %v1461 = vadd.f32 0.0, %v1460
    %v1462 = vpop.f32.mrb[0].mxu0
    %1463 = vmatprep.mubr.f32.mxu0 0.0
    %1464 = vmatmul.mubr.f32.gmra.mrb[0].mxu0 %v1338
    %v1465 = vpop.f32.mrb[0].mxu0
    %v1466 = vadd.f32 0.0, %v1465
    %v1467 = vpop.f32.mrb[0].mxu0
    %1468 = vmatprep.mubr.f32.mxu0 0.0
    %1469 = vmatmul.mubr.f32.gmra.mrb[0].mxu0 %v1341
    %v1470 = vpop.f32.mrb[0].mxu0
    %v1471 = vadd.f32 0.0, %v1470
    %v1472 = vpop.f32.mrb[0].mxu0
    %1473 = vmatprep.mubr.f32.mxu0 0.0
    %1474 = vmatmul.mubr.f32.gmra.mrb[0].mxu0 %v1344
    %v1475 = vpop.f32.mrb[0].mxu0
    %v1476 = vadd.f32 0.0, %v1475
    %v1477 = vpop.f32.mrb[0].mxu0
    %1478 = vmatprep.mubr.f32.mxu0 0.0
    %1479 = vmatmul.mubr.f32.gmra.mrb[0].mxu0 %v1347
    %v1480 = vpop.f32.mrb[0].mxu0
    %v1481 = vadd.f32 0.0, %v1480
    %v1482 = vpop.f32.mrb[0].mxu0
    %1483 = vmatprep.mubr.f32.mxu0 0.0
    %1484 = vmatmul.mubr.f32.gmra.mrb[0].mxu0 %v1350
    %v1485 = vpop.f32.mrb[0].mxu0
    %v1486 = vadd.f32 0.0, %v1485
    %v1487 = vpop.f32.mrb[0].mxu0
    %1488 = vmatprep.mubr.f32.mxu0 0.0
    %1489 = vmatmul.mubr.f32.gmra.mrb[0].mxu0 %v1353
    %v1490 = vpop.f32.mrb[0].mxu0
    %v1491 = vadd.f32 0.0, %v1490
    %v1492 = vpop.f32.mrb[0].mxu0
    %1493 = vmatprep.mubr.f32.mxu0 0.0
    %1494 = vmatmul.mubr.f32.gmra.mrb[0].mxu0 %v1356
    %v1495 = vpop.f32.mrb[0].mxu0
    %v1496 = vadd.f32 0.0, %v1495
    %v1497 = vpop.f32.mrb[0].mxu0
    %1498 = vmatprep.mubr.f32.mxu0 0.0
    %1499 = vmatmul.mubr.f32.gmra.mrb[0].mxu0 %v1359
    %v1500 = vpop.f32.mrb[0].mxu0
    %v1501 = vadd.f32 0.0, %v1500
    %v1502 = vpop.f32.mrb[0].mxu0
    %1503 = vmatprep.mubr.f32.mxu0 0.0
    %1504 = vmatmul.mubr.f32.gmra.mrb[0].mxu0 %v1362
    %v1505 = vpop.f32.mrb[0].mxu0
    %v1506 = vadd.f32 0.0, %v1505
    %v1507 = vpop.f32.mrb[0].mxu0
    %1508 = vdwg.mxu0
    %v1509 = vld [vmem:[%s8] sm:$0x1]
    %v1511 = vlaneseq
    %v1512 = vshrl.u32 %v1511, 7
    %v1513 = vsub.s32 0, %v1512
    %v1514 = vrot.slane %v1509, %v1513
    %v1516 = vmul.f32 %v1431, %v1514
    %v1517 = vmul.f32 %v1436, %v1514
    %v1518 = vmul.f32 %v1441, %v1514
    %v1519 = vmul.f32 %v1446, %v1514
    %v1520 = vmul.f32 %v1451, %v1514
    %v1521 = vmul.f32 %v1456, %v1514
    %v1522 = vmul.f32 %v1461, %v1514
    %v1523 = vmul.f32 %v1466, %v1514
    %v1524 = vmul.f32 %v1471, %v1514
    %v1525 = vmul.f32 %v1476, %v1514
    %v1526 = vmul.f32 %v1481, %v1514
    %v1527 = vmul.f32 %v1486, %v1514
    %v1528 = vmul.f32 %v1491, %v1514
    %v1529 = vmul.f32 %v1496, %v1514
    %v1530 = vmul.f32 %v1501, %v1514
    %v1531 = vmul.f32 %v1506, %v1514
    %v1532 = vld [vmem:[%s9] sm:$0x1]
    %v1534 = vlaneseq
    %v1535 = vshrl.u32 %v1534, 7
    %v1536 = vsub.s32 0, %v1535
    %v1537 = vrot.slane %v1532, %v1536
    %v1539 = vadd.f32 %v1516, %v1537
    %v1540 = vadd.f32 %v1517, %v1537
    %v1541 = vadd.f32 %v1518, %v1537
    %v1542 = vadd.f32 %v1519, %v1537
    %v1543 = vadd.f32 %v1520, %v1537
    %v1544 = vadd.f32 %v1521, %v1537
    %v1545 = vadd.f32 %v1522, %v1537
    %v1546 = vadd.f32 %v1523, %v1537
    %v1547 = vadd.f32 %v1524, %v1537
    %v1548 = vadd.f32 %v1525, %v1537
    %v1549 = vadd.f32 %v1526, %v1537
    %v1550 = vadd.f32 %v1527, %v1537
    %v1551 = vadd.f32 %v1528, %v1537
    %v1552 = vadd.f32 %v1529, %v1537
    %v1553 = vadd.f32 %v1530, %v1537
    %v1554 = vadd.f32 %v1531, %v1537
    %v1555 = vadd.f32 %v1539, %v50
    %v1556 = vadd.f32 %v1540, %v51
    %v1557 = vadd.f32 %v1541, %v52
    %v1558 = vadd.f32 %v1542, %v53
    %v1559 = vadd.f32 %v1543, %v54
    %v1560 = vadd.f32 %v1544, %v55
    %v1561 = vadd.f32 %v1545, %v56
    %v1562 = vadd.f32 %v1546, %v57
    %v1563 = vadd.f32 %v1547, %v58
    %v1564 = vadd.f32 %v1548, %v59
    %v1565 = vadd.f32 %v1549, %v60
    %v1566 = vadd.f32 %v1550, %v61
    %v1567 = vadd.f32 %v1551, %v62
    %v1568 = vadd.f32 %v1552, %v63
    %v1569 = vadd.f32 %v1553, %v64
    %v1570 = vadd.f32 %v1554, %v65
    %v1571 = vmax.f32 %v1555, 0.0
    %v1572 = vmax.f32 %v1556, 0.0
    %v1573 = vmax.f32 %v1557, 0.0
    %v1574 = vmax.f32 %v1558, 0.0
    %v1575 = vmax.f32 %v1559, 0.0
    %v1576 = vmax.f32 %v1560, 0.0
    %v1577 = vmax.f32 %v1561, 0.0
    %v1578 = vmax.f32 %v1562, 0.0
    %v1579 = vmax.f32 %v1563, 0.0
    %v1580 = vmax.f32 %v1564, 0.0
    %v1581 = vmax.f32 %v1565, 0.0
    %v1582 = vmax.f32 %v1566, 0.0
    %v1583 = vmax.f32 %v1567, 0.0
    %v1584 = vmax.f32 %v1568, 0.0
    %v1585 = vmax.f32 %v1569, 0.0
    %v1586 = vmax.f32 %v1570, 0.0
    %1587 = vst [vmem:[#allocation5] sm:$0xff] %v1571
    %1588 = vst [vmem:[#allocation5 + $0x8] sm:$0xff] %v1572
    %1589 = vst [vmem:[#allocation5 + $0x10] sm:$0xff] %v1573
    %1590 = vst [vmem:[#allocation5 + $0x18] sm:$0xff] %v1574
    %1591 = vst [vmem:[#allocation5 + $0x20] sm:$0xff] %v1575
    %1592 = vst [vmem:[#allocation5 + $0x28] sm:$0xff] %v1576
    %1593 = vst [vmem:[#allocation5 + $0x30] sm:$0xff] %v1577
    %1594 = vst [vmem:[#allocation5 + $0x38] sm:$0xff] %v1578
    %1595 = vst [vmem:[#allocation5 + $0x40] sm:$0xff] %v1579
    %1596 = vst [vmem:[#allocation5 + $0x48] sm:$0xff] %v1580
    %1597 = vst [vmem:[#allocation5 + $0x50] sm:$0xff] %v1581
    %1598 = vst [vmem:[#allocation5 + $0x58] sm:$0xff] %v1582
    %1599 = vst [vmem:[#allocation5 + $0x60] sm:$0xff] %v1583
    %1600 = vst [vmem:[#allocation5 + $0x68] sm:$0xff] %v1584
    %1601 = vst [vmem:[#allocation5 + $0x70] sm:$0xff] %v1585
    %1602 = vst [vmem:[#allocation5 + $0x78] sm:$0xff] %v1586
    // Predicated region
    $region46: #{block_forward_nchw.1} parent=1 // pred_check
      _
    $region47: #{block_forward_nchw.1} parent=1 // pred_check_branch
      %1604 = sbr.rel (0) target = $region49
    $region48: #{block_forward_nchw.1} parent=1 // pred_region
      %s1606 = ssub.s32 2048, 2048
      %1607 = vsyncadd [#allocation4], %s1606
      %s1608 = sshll.u32 [#allocation5], 4
      %s1609 = int_to_ptr.vmem [resolvable:$true] %s1608
      %1614 = dma.vmem_to_hbm [thread:$0]  %s1609, 2048, %s10, [#allocation4], 128, 128, 8
    $region49: #{block_forward_nchw.1} parent=1 // pred_fallthru
      _
    // Predicated region
    $region50: #{block_forward_nchw.1} parent=1 // pred_check
      _
    $region51: #{block_forward_nchw.1} parent=1 // pred_check_branch
      %1616 = sbr.rel (0) target = $region53
    $region52: #{block_forward_nchw.1} parent=1 // pred_region
      %1617 = dma.done [#allocation4], 2048
    $region53: #{block_forward_nchw.1} parent=1 // pred_fallthru
      _
    %1618 = vsyncpa [#allocation3], 1
    %1619 = vsyncpa [#allocation4], 1

</llo_original>
